<compile_context>
chip_gen: v6e
topology: v6e:2x2x1
jax: 0.10.0
libtpu: 0.0.40
codegen_flags: <defaults>
</compile_context>

<pallas_src>
import functools

import jax
import jax.numpy as jnp
from jax.experimental import pallas as pl
from jax.experimental.pallas import tpu as pltpu  # noqa: F401 (TPU backend)

# ---------------- model config (small, consistent with the module) -----------
BS = 2           # batch size
NUM_NODES = 8    # N
NUM_PATCH = 4    # L
PATCH_SIZE = 8   # f   (time_length_origin = NUM_PATCH * PATCH_SIZE = 32)
HIDDEN = 16      # hidden_dim H
K_CHEB = 3       # Chebyshev order
TOP_K = 3        # top-k neighbors in adjacency


def _group_id(idx, n):
    """idx // n for int32 vectors; uses a shift when n is a power of two."""
    if (n & (n - 1)) == 0:
        return idx >> (n.bit_length() - 1)
    return idx // n


def stgnn_fused_kernel(x_ref, filt_ref, wih_ref, whh_ref, bih_ref, bhh_ref,
                       wfc_ref, bfc_ref, out_ref, *,
                       bs, n_nodes, n_patch, patch, hidden, k_cheb, top_k):
    f32 = jnp.float32
    N, L, f, H = n_nodes, n_patch, patch, hidden
    BN = bs * N                      # GRU "batch" (bs * num_nodes)
    R = L * BN                       # total graph rows, ordered (l, b, n)

    # ---- 1. in-VMEM rearrange (bs*N, L*f) -> (R, f), rows ordered (l,b,n) ---
    x2d = x_ref[...].astype(f32)                                  # (bs*N, L*f)
    x_all = jnp.concatenate(
        [x2d[b * N:(b + 1) * N, l * f:(l + 1) * f]
         for l in range(L) for b in range(bs)], axis=0)           # (R, f)

    # ---- 2. adjacency for all bs*L graphs at once ---------------------------
    sq = jnp.sum(x_all * x_all, axis=-1, keepdims=True)           # (R, 1)
    gram = jax.lax.dot_general(x_all, x_all, (((1,), (1,)), ((), ())),
                               preferred_element_type=f32)        # (R, R)
    d2 = jnp.maximum(sq + sq.T - 2.0 * gram, 0.0)                 # == cdist**2
    sim = jnp.exp(-d2)

    row_i = jax.lax.broadcasted_iota(jnp.int32, (R, R), 0)
    col_i = jax.lax.broadcasted_iota(jnp.int32, (R, R), 1)
    in_group = _group_id(row_i, N) == _group_id(col_i, N)
    sim = jnp.where(in_group, sim, 0.0)          # block-diagonal similarities

    # top-k per row via iterative first-argmax (ties -> lowest column index).
    # In-group sims are > 0 (diagonal is exp(0)=1) and out-of-group entries are
    # exactly 0, so selections stay in-group whenever a positive in-group
    # candidate exists; otherwise the selected value is 0 and the resulting
    # adjacency entry matches the reference (0) anyway.
    work = sim
    mask = jnp.zeros_like(sim)
    for _ in range(top_k):
        row_max = jnp.max(work, axis=-1, keepdims=True)
        is_max = work == row_max
        first = jnp.min(jnp.where(is_max, col_i, R), axis=-1, keepdims=True)
        onehot = (col_i == first).astype(f32)
        mask = mask + onehot
        work = jnp.where(onehot > 0, -1.0, work)  # sims >= 0: never re-picked
    adj = sim * mask                              # (R, R), block-diagonal

    # ---- 3. ChebNet: out = sum_k T_k(adj) @ W_k (Chebyshev recurrence) ------
    tx0 = x_all
    cheb = jnp.dot(tx0, filt_ref[0], preferred_element_type=f32)  # (R, H)
    if k_cheb > 1:
        tx1 = jnp.dot(adj, x_all, preferred_element_type=f32)
        cheb = cheb + jnp.dot(tx1, filt_ref[1], preferred_element_type=f32)
        for k in range(2, k_cheb):
            tx2 = 2.0 * jnp.dot(adj, tx1, preferred_element_type=f32) - tx0
            cheb = cheb + jnp.dot(tx2, filt_ref[k],
                                  preferred_element_type=f32)
            tx0, tx1 = tx1, tx2

    # ---- 4. GRU over the L patches (input projection hoisted out of loop) ---
    gi_all = (jnp.dot(cheb, wih_ref[...], preferred_element_type=f32)
              + bih_ref[...])                                     # (R, 3H)
    whh = whh_ref[...]
    bhh = bhh_ref[...]
    wfc = jnp.concatenate([wfc_ref[...]] * bs, axis=0)            # (BN, L*H)

    h = jnp.zeros((BN, H), f32)
    fc_acc = jnp.zeros((BN, 1), f32)
    for t in range(L):                 # static unroll; serial recurrence
        gi = gi_all[t * BN:(t + 1) * BN, :]        # rows ordered (b, n)
        gh = jnp.dot(h, whh, preferred_element_type=f32) + bhh
        r = jax.nn.sigmoid(gi[:, :H] + gh[:, :H])
        z = jax.nn.sigmoid(gi[:, H:2 * H] + gh[:, H:2 * H])
        nn_ = jnp.tanh(gi[:, 2 * H:] + r * gh[:, 2 * H:])
        h = (1.0 - z) * nn_ + z * h
        # FC head folded into the recurrence: row-wise dot with its weight slice
        fc_acc = fc_acc + jnp.sum(h * wfc[:, t * H:(t + 1) * H],
                                  axis=-1, keepdims=True)

    # ---- 5. FC head: sum node contributions per batch element + bias -------
    rb = jax.lax.broadcasted_iota(jnp.int32, (bs, BN), 0)
    cb = jax.lax.broadcasted_iota(jnp.int32, (bs, BN), 1)
    sel = (_group_id(cb, N) == rb).astype(f32)                    # (bs, BN)
    rul = jnp.dot(sel, fc_acc, preferred_element_type=f32) + bfc_ref[...]
    out_ref[...] = rul.astype(out_ref.dtype)


# ---------------------------- full forward pass -------------------------------
def stgnn_forward(x, params):
    bs, n_nodes, _ = x.shape
    x2d = x.reshape(bs * n_nodes, NUM_PATCH * PATCH_SIZE)   # pure reshape
    kern = functools.partial(
        stgnn_fused_kernel, bs=bs, n_nodes=n_nodes, n_patch=NUM_PATCH,
        patch=PATCH_SIZE, hidden=HIDDEN, k_cheb=K_CHEB, top_k=TOP_K)
    # No grid: every operand (< 10 KiB total) is brought whole into VMEM, and
    # only the (bs, 1) result goes back to HBM.
    return pl.pallas_call(
        kern,
        out_shape=jax.ShapeDtypeStruct((bs, 1), jnp.float32),
    )(x2d, params["filters"], params["wih_t"], params["whh_t"],
      params["bih"], params["bhh"], params["fc_w2"], params["fc_b"])


# --------------------------- deterministic params -----------------------------
def init_params(key):
    kf, k1, k2, k3, k4, k5, k6 = jax.random.split(key, 7)
    # ChebNet filters (K, f, H): xavier-uniform
    bound = (6.0 / (PATCH_SIZE + HIDDEN)) ** 0.5
    filters = jax.random.uniform(kf, (K_CHEB, PATCH_SIZE, HIDDEN),
                                 jnp.float32, -bound, bound)
    # GRU weights (PyTorch layout: (3H, H), gate order r, z, n) -> transposed
    s = 1.0 / (HIDDEN ** 0.5)
    wih = jax.random.uniform(k1, (3 * HIDDEN, HIDDEN), jnp.float32, -s, s)
    whh = jax.random.uniform(k2, (3 * HIDDEN, HIDDEN), jnp.float32, -s, s)
    bih = jax.random.uniform(k3, (3 * HIDDEN,), jnp.float32, -s, s)
    bhh = jax.random.uniform(k4, (3 * HIDDEN,), jnp.float32, -s, s)
    # FC head: in_features = H * L * N; row n of fc_w2 holds the (L*H)
    # coefficients of node n, matching the (n, l, h) flatten order of
    # gru_output.reshape(bs, -1) in the PyTorch reference.
    D = HIDDEN * NUM_PATCH * NUM_NODES
    sf = 1.0 / (D ** 0.5)
    fc_w = jax.random.uniform(k5, (D, 1), jnp.float32, -sf, sf)
    fc_b = jax.random.uniform(k6, (1, 1), jnp.float32, -sf, sf)
    return dict(
        filters=filters,
        wih_t=wih.T, whh_t=whh.T,
        bih=bih.reshape(1, -1), bhh=bhh.reshape(1, -1),
        fc_w2=fc_w.reshape(NUM_NODES, NUM_PATCH * HIDDEN),
        fc_b=fc_b)


if __name__ == "__main__":
    key = jax.random.PRNGKey(0)
    kx, kp = jax.random.split(key)
    x = jax.random.normal(
        kx, (BS, NUM_NODES, NUM_PATCH * PATCH_SIZE), jnp.float32)
    params = init_params(kp)

    out = jax.jit(stgnn_forward)(x, params)
    jax.block_until_ready(out)
    assert out.shape == (BS, 1)
    print("KERNEL_OK")
</pallas_src>

<mosaic_0001>
module attributes {stable_mosaic.version = 11 : i64} {
  func.func @stgnn_fused_kernel(%arg0: memref<16x32xf32, #tpu.memory_space<vmem>>, %arg1: memref<3x8x16xf32, #tpu.memory_space<vmem>>, %arg2: memref<16x48xf32, #tpu.memory_space<vmem>>, %arg3: memref<16x48xf32, #tpu.memory_space<vmem>>, %arg4: memref<1x48xf32, #tpu.memory_space<vmem>>, %arg5: memref<1x48xf32, #tpu.memory_space<vmem>>, %arg6: memref<8x64xf32, #tpu.memory_space<vmem>>, %arg7: memref<1x1xf32, #tpu.memory_space<vmem>>, %arg8: memref<2x1xf32, #tpu.memory_space<vmem>>) attributes {dimension_semantics = [], scalar_prefetch = 0 : i64, scratch_operands = 0 : i64, tpu.core_type = #tpu.core_type<tc>} {
    %c0 = arith.constant 0 : index
    %c0_0 = arith.constant 0 : index
    %0 = vector.load %arg0[%c0, %c0_0] : memref<16x32xf32, #tpu.memory_space<vmem>>, vector<16x32xf32>
    %1 = vector.extract_strided_slice %0 {offsets = [0, 0], sizes = [8, 8], strides = [1, 1]} : vector<16x32xf32> to vector<8x8xf32>
    %2 = vector.extract_strided_slice %0 {offsets = [8, 0], sizes = [8, 8], strides = [1, 1]} : vector<16x32xf32> to vector<8x8xf32>
    %3 = vector.extract_strided_slice %0 {offsets = [0, 8], sizes = [8, 8], strides = [1, 1]} : vector<16x32xf32> to vector<8x8xf32>
    %4 = vector.extract_strided_slice %0 {offsets = [8, 8], sizes = [8, 8], strides = [1, 1]} : vector<16x32xf32> to vector<8x8xf32>
    %5 = vector.extract_strided_slice %0 {offsets = [0, 16], sizes = [8, 8], strides = [1, 1]} : vector<16x32xf32> to vector<8x8xf32>
    %6 = vector.extract_strided_slice %0 {offsets = [8, 16], sizes = [8, 8], strides = [1, 1]} : vector<16x32xf32> to vector<8x8xf32>
    %7 = vector.extract_strided_slice %0 {offsets = [0, 24], sizes = [8, 8], strides = [1, 1]} : vector<16x32xf32> to vector<8x8xf32>
    %8 = vector.extract_strided_slice %0 {offsets = [8, 24], sizes = [8, 8], strides = [1, 1]} : vector<16x32xf32> to vector<8x8xf32>
    %9 = tpu.concatenate %1, %2, %3, %4, %5, %6, %7, %8 in 0 : vector<8x8xf32>, vector<8x8xf32>, vector<8x8xf32>, vector<8x8xf32>, vector<8x8xf32>, vector<8x8xf32>, vector<8x8xf32>, vector<8x8xf32> -> vector<64x8xf32>
    %10 = arith.mulf %9, %9 : vector<64x8xf32>
    %cst = arith.constant dense<0.000000e+00> : vector<64xf32>
    %11 = vector.multi_reduction <add>, %10, %cst [1] : vector<64x8xf32> to vector<64xf32>
    %12 = vector.shape_cast %11 : vector<64xf32> to vector<64x1xf32>
    %cst_1 = arith.constant dense<0.000000e+00> : vector<64x64xf32>
    %13 = tpu.matmul %9, %9, %cst_1 {dimension_numbers = #tpu.dot_dimension_numbers<[1], [1], [0], [0], [0, 0, 1, 0], [], []>} : vector<64x8xf32>, vector<64x8xf32>, vector<64x64xf32> -> vector<64x64xf32>
    %14 = tpu.transpose %12, [1, 0] : vector<64x1xf32> -> vector<1x64xf32>
    %15 = vector.broadcast %12 : vector<64x1xf32> to vector<64x64xf32>
    %16 = vector.broadcast %14 : vector<1x64xf32> to vector<64x64xf32>
    %17 = arith.addf %15, %16 : vector<64x64xf32>
    %cst_2 = arith.constant 2.000000e+00 : f32
    %18 = vector.broadcast %cst_2 : f32 to vector<64x64xf32>
    %19 = arith.mulf %18, %13 : vector<64x64xf32>
    %20 = arith.subf %17, %19 : vector<64x64xf32>
    %cst_3 = arith.constant 0.000000e+00 : f32
    %21 = vector.broadcast %cst_3 : f32 to vector<64x64xf32>
    %22 = arith.maximumf %20, %21 : vector<64x64xf32>
    %cst_4 = arith.constant 0.000000e+00 : f32
    %23 = vector.broadcast %cst_4 : f32 to vector<64x64xf32>
    %24 = arith.subf %23, %22 : vector<64x64xf32>
    %25 = math.exp %24 : vector<64x64xf32>
    %26 = tpu.iota {dimensions = array<i32: 0>} : vector<64x64xi32>
    %27 = tpu.iota {dimensions = array<i32: 1>} : vector<64x64xi32>
    %c3_i32 = arith.constant 3 : i32
    %28 = vector.broadcast %c3_i32 : i32 to vector<64x64xi32>
    %29 = arith.shrsi %26, %28 : vector<64x64xi32>
    %c3_i32_5 = arith.constant 3 : i32
    %30 = vector.broadcast %c3_i32_5 : i32 to vector<64x64xi32>
    %31 = arith.shrsi %27, %30 : vector<64x64xi32>
    %32 = arith.cmpi eq, %29, %31 : vector<64x64xi32>
    %cst_6 = arith.constant 0.000000e+00 : f32
    %33 = vector.broadcast %cst_6 : f32 to vector<64x64xf32>
    %34 = arith.select %32, %25, %33 : vector<64x64xi1>, vector<64x64xf32>
    %cst_7 = arith.constant 0.000000e+00 : f32
    %35 = vector.broadcast %cst_7 : f32 to vector<64x64xf32>
    %cst_8 = arith.constant dense<0xFF800000> : vector<64xf32>
    %36 = vector.multi_reduction <maximumf>, %34, %cst_8 [1] : vector<64x64xf32> to vector<64xf32>
    %37 = vector.shape_cast %36 : vector<64xf32> to vector<64x1xf32>
    %38 = vector.broadcast %37 : vector<64x1xf32> to vector<64x64xf32>
    %39 = arith.cmpf oeq, %34, %38 : vector<64x64xf32>
    %c64_i32 = arith.constant 64 : i32
    %40 = vector.broadcast %c64_i32 : i32 to vector<64x64xi32>
    %41 = arith.select %39, %27, %40 : vector<64x64xi1>, vector<64x64xi32>
    %cst_9 = arith.constant dense<2147483647> : vector<64xi32>
    %42 = vector.multi_reduction <minsi>, %41, %cst_9 [1] : vector<64x64xi32> to vector<64xi32>
    %43 = vector.shape_cast %42 : vector<64xi32> to vector<64x1xi32>
    %44 = vector.broadcast %43 : vector<64x1xi32> to vector<64x64xi32>
    %45 = arith.cmpi eq, %27, %44 : vector<64x64xi32>
    %46 = arith.extui %45 : vector<64x64xi1> to vector<64x64xi32>
    %47 = arith.sitofp %46 : vector<64x64xi32> to vector<64x64xf32>
    %48 = arith.addf %35, %47 : vector<64x64xf32>
    %cst_10 = arith.constant 0.000000e+00 : f32
    %49 = vector.broadcast %cst_10 : f32 to vector<64x64xf32>
    %50 = arith.cmpf ogt, %47, %49 : vector<64x64xf32>
    %cst_11 = arith.constant -1.000000e+00 : f32
    %51 = vector.broadcast %cst_11 : f32 to vector<64x64xf32>
    %52 = arith.select %50, %51, %34 : vector<64x64xi1>, vector<64x64xf32>
    %cst_12 = arith.constant dense<0xFF800000> : vector<64xf32>
    %53 = vector.multi_reduction <maximumf>, %52, %cst_12 [1] : vector<64x64xf32> to vector<64xf32>
    %54 = vector.shape_cast %53 : vector<64xf32> to vector<64x1xf32>
    %55 = vector.broadcast %54 : vector<64x1xf32> to vector<64x64xf32>
    %56 = arith.cmpf oeq, %52, %55 : vector<64x64xf32>
    %c64_i32_13 = arith.constant 64 : i32
    %57 = vector.broadcast %c64_i32_13 : i32 to vector<64x64xi32>
    %58 = arith.select %56, %27, %57 : vector<64x64xi1>, vector<64x64xi32>
    %cst_14 = arith.constant dense<2147483647> : vector<64xi32>
    %59 = vector.multi_reduction <minsi>, %58, %cst_14 [1] : vector<64x64xi32> to vector<64xi32>
    %60 = vector.shape_cast %59 : vector<64xi32> to vector<64x1xi32>
    %61 = vector.broadcast %60 : vector<64x1xi32> to vector<64x64xi32>
    %62 = arith.cmpi eq, %27, %61 : vector<64x64xi32>
    %63 = arith.extui %62 : vector<64x64xi1> to vector<64x64xi32>
    %64 = arith.sitofp %63 : vector<64x64xi32> to vector<64x64xf32>
    %65 = arith.addf %48, %64 : vector<64x64xf32>
    %cst_15 = arith.constant 0.000000e+00 : f32
    %66 = vector.broadcast %cst_15 : f32 to vector<64x64xf32>
    %67 = arith.cmpf ogt, %64, %66 : vector<64x64xf32>
    %cst_16 = arith.constant -1.000000e+00 : f32
    %68 = vector.broadcast %cst_16 : f32 to vector<64x64xf32>
    %69 = arith.select %67, %68, %52 : vector<64x64xi1>, vector<64x64xf32>
    %cst_17 = arith.constant dense<0xFF800000> : vector<64xf32>
    %70 = vector.multi_reduction <maximumf>, %69, %cst_17 [1] : vector<64x64xf32> to vector<64xf32>
    %71 = vector.shape_cast %70 : vector<64xf32> to vector<64x1xf32>
    %72 = vector.broadcast %71 : vector<64x1xf32> to vector<64x64xf32>
    %73 = arith.cmpf oeq, %69, %72 : vector<64x64xf32>
    %c64_i32_18 = arith.constant 64 : i32
    %74 = vector.broadcast %c64_i32_18 : i32 to vector<64x64xi32>
    %75 = arith.select %73, %27, %74 : vector<64x64xi1>, vector<64x64xi32>
    %cst_19 = arith.constant dense<2147483647> : vector<64xi32>
    %76 = vector.multi_reduction <minsi>, %75, %cst_19 [1] : vector<64x64xi32> to vector<64xi32>
    %77 = vector.shape_cast %76 : vector<64xi32> to vector<64x1xi32>
    %78 = vector.broadcast %77 : vector<64x1xi32> to vector<64x64xi32>
    %79 = arith.cmpi eq, %27, %78 : vector<64x64xi32>
    %80 = arith.extui %79 : vector<64x64xi1> to vector<64x64xi32>
    %81 = arith.sitofp %80 : vector<64x64xi32> to vector<64x64xf32>
    %82 = arith.addf %65, %81 : vector<64x64xf32>
    %83 = arith.mulf %34, %82 : vector<64x64xf32>
    %c0_20 = arith.constant 0 : index
    %c0_21 = arith.constant 0 : index
    %c0_22 = arith.constant 0 : index
    %84 = vector.load %arg1[%c0_20, %c0_21, %c0_22] : memref<3x8x16xf32, #tpu.memory_space<vmem>>, vector<1x8x16xf32>
    %85 = vector.shape_cast %84 : vector<1x8x16xf32> to vector<8x16xf32>
    %cst_23 = arith.constant dense<0.000000e+00> : vector<64x16xf32>
    %86 = tpu.matmul %9, %85, %cst_23 {dimension_numbers = #tpu.dot_dimension_numbers<[1], [0], [0], [1], [0, 0, 1, 1], [], []>} : vector<64x8xf32>, vector<8x16xf32>, vector<64x16xf32> -> vector<64x16xf32>
    %cst_24 = arith.constant dense<0.000000e+00> : vector<64x8xf32>
    %87 = tpu.matmul %83, %9, %cst_24 {dimension_numbers = #tpu.dot_dimension_numbers<[1], [0], [0], [1], [0, 0, 1, 1], [], []>} : vector<64x64xf32>, vector<64x8xf32>, vector<64x8xf32> -> vector<64x8xf32>
    %c1 = arith.constant 1 : index
    %c0_25 = arith.constant 0 : index
    %c0_26 = arith.constant 0 : index
    %88 = vector.load %arg1[%c1, %c0_25, %c0_26] : memref<3x8x16xf32, #tpu.memory_space<vmem>>, vector<1x8x16xf32>
    %89 = vector.shape_cast %88 : vector<1x8x16xf32> to vector<8x16xf32>
    %cst_27 = arith.constant dense<0.000000e+00> : vector<64x16xf32>
    %90 = tpu.matmul %87, %89, %cst_27 {dimension_numbers = #tpu.dot_dimension_numbers<[1], [0], [0], [1], [0, 0, 1, 1], [], []>} : vector<64x8xf32>, vector<8x16xf32>, vector<64x16xf32> -> vector<64x16xf32>
    %91 = arith.addf %86, %90 : vector<64x16xf32>
    %cst_28 = arith.constant dense<0.000000e+00> : vector<64x8xf32>
    %92 = tpu.matmul %83, %87, %cst_28 {dimension_numbers = #tpu.dot_dimension_numbers<[1], [0], [0], [1], [0, 0, 1, 1], [], []>} : vector<64x64xf32>, vector<64x8xf32>, vector<64x8xf32> -> vector<64x8xf32>
    %cst_29 = arith.constant 2.000000e+00 : f32
    %93 = vector.broadcast %cst_29 : f32 to vector<64x8xf32>
    %94 = arith.mulf %93, %92 : vector<64x8xf32>
    %95 = arith.subf %94, %9 : vector<64x8xf32>
    %c2 = arith.constant 2 : index
    %c0_30 = arith.constant 0 : index
    %c0_31 = arith.constant 0 : index
    %96 = vector.load %arg1[%c2, %c0_30, %c0_31] : memref<3x8x16xf32, #tpu.memory_space<vmem>>, vector<1x8x16xf32>
    %97 = vector.shape_cast %96 : vector<1x8x16xf32> to vector<8x16xf32>
    %cst_32 = arith.constant dense<0.000000e+00> : vector<64x16xf32>
    %98 = tpu.matmul %95, %97, %cst_32 {dimension_numbers = #tpu.dot_dimension_numbers<[1], [0], [0], [1], [0, 0, 1, 1], [], []>} : vector<64x8xf32>, vector<8x16xf32>, vector<64x16xf32> -> vector<64x16xf32>
    %99 = arith.addf %91, %98 : vector<64x16xf32>
    %c0_33 = arith.constant 0 : index
    %c0_34 = arith.constant 0 : index
    %100 = vector.load %arg2[%c0_33, %c0_34] : memref<16x48xf32, #tpu.memory_space<vmem>>, vector<16x48xf32>
    %cst_35 = arith.constant dense<0.000000e+00> : vector<64x48xf32>
    %101 = tpu.matmul %99, %100, %cst_35 {dimension_numbers = #tpu.dot_dimension_numbers<[1], [0], [0], [1], [0, 0, 1, 1], [], []>} : vector<64x16xf32>, vector<16x48xf32>, vector<64x48xf32> -> vector<64x48xf32>
    %c0_36 = arith.constant 0 : index
    %c0_37 = arith.constant 0 : index
    %102 = vector.load %arg4[%c0_36, %c0_37] : memref<1x48xf32, #tpu.memory_space<vmem>>, vector<1x48xf32>
    %103 = vector.broadcast %102 : vector<1x48xf32> to vector<64x48xf32>
    %104 = arith.addf %101, %103 : vector<64x48xf32>
    %c0_38 = arith.constant 0 : index
    %c0_39 = arith.constant 0 : index
    %105 = vector.load %arg3[%c0_38, %c0_39] : memref<16x48xf32, #tpu.memory_space<vmem>>, vector<16x48xf32>
    %c0_40 = arith.constant 0 : index
    %c0_41 = arith.constant 0 : index
    %106 = vector.load %arg5[%c0_40, %c0_41] : memref<1x48xf32, #tpu.memory_space<vmem>>, vector<1x48xf32>
    %c0_42 = arith.constant 0 : index
    %c0_43 = arith.constant 0 : index
    %107 = vector.load %arg6[%c0_42, %c0_43] : memref<8x64xf32, #tpu.memory_space<vmem>>, vector<8x64xf32>
    %108 = tpu.concatenate %107, %107 in 0 : vector<8x64xf32>, vector<8x64xf32> -> vector<16x64xf32>
    %cst_44 = arith.constant 0.000000e+00 : f32
    %109 = vector.broadcast %cst_44 : f32 to vector<16x16xf32>
    %cst_45 = arith.constant 0.000000e+00 : f32
    %110 = vector.broadcast %cst_45 : f32 to vector<16x1xf32>
    %111 = vector.extract_strided_slice %104 {offsets = [0, 0], sizes = [16, 48], strides = [1, 1]} : vector<64x48xf32> to vector<16x48xf32>
    %cst_46 = arith.constant dense<0.000000e+00> : vector<16x48xf32>
    %112 = tpu.matmul %109, %105, %cst_46 {dimension_numbers = #tpu.dot_dimension_numbers<[1], [0], [0], [1], [0, 0, 1, 1], [], []>} : vector<16x16xf32>, vector<16x48xf32>, vector<16x48xf32> -> vector<16x48xf32>
    %113 = vector.broadcast %106 : vector<1x48xf32> to vector<16x48xf32>
    %114 = arith.addf %112, %113 : vector<16x48xf32>
    %115 = vector.extract_strided_slice %111 {offsets = [0, 0], sizes = [16, 16], strides = [1, 1]} : vector<16x48xf32> to vector<16x16xf32>
    %116 = vector.extract_strided_slice %114 {offsets = [0, 0], sizes = [16, 16], strides = [1, 1]} : vector<16x48xf32> to vector<16x16xf32>
    %117 = arith.addf %115, %116 : vector<16x16xf32>
    %118 = arith.negf %117 : vector<16x16xf32>
    %119 = math.exp %118 : vector<16x16xf32>
    %cst_47 = arith.constant 1.000000e+00 : f32
    %120 = vector.broadcast %cst_47 : f32 to vector<16x16xf32>
    %121 = arith.addf %120, %119 : vector<16x16xf32>
    %122 = arith.divf %120, %121 : vector<16x16xf32>
    %123 = vector.extract_strided_slice %111 {offsets = [0, 16], sizes = [16, 16], strides = [1, 1]} : vector<16x48xf32> to vector<16x16xf32>
    %124 = vector.extract_strided_slice %114 {offsets = [0, 16], sizes = [16, 16], strides = [1, 1]} : vector<16x48xf32> to vector<16x16xf32>
    %125 = arith.addf %123, %124 : vector<16x16xf32>
    %126 = arith.negf %125 : vector<16x16xf32>
    %127 = math.exp %126 : vector<16x16xf32>
    %cst_48 = arith.constant 1.000000e+00 : f32
    %128 = vector.broadcast %cst_48 : f32 to vector<16x16xf32>
    %129 = arith.addf %128, %127 : vector<16x16xf32>
    %130 = arith.divf %128, %129 : vector<16x16xf32>
    %131 = vector.extract_strided_slice %111 {offsets = [0, 32], sizes = [16, 16], strides = [1, 1]} : vector<16x48xf32> to vector<16x16xf32>
    %132 = vector.extract_strided_slice %114 {offsets = [0, 32], sizes = [16, 16], strides = [1, 1]} : vector<16x48xf32> to vector<16x16xf32>
    %133 = arith.mulf %122, %132 : vector<16x16xf32>
    %134 = arith.addf %131, %133 : vector<16x16xf32>
    %135 = math.tanh %134 : vector<16x16xf32>
    %cst_49 = arith.constant 1.000000e+00 : f32
    %136 = vector.broadcast %cst_49 : f32 to vector<16x16xf32>
    %137 = arith.subf %136, %130 : vector<16x16xf32>
    %138 = arith.mulf %137, %135 : vector<16x16xf32>
    %139 = arith.mulf %130, %109 : vector<16x16xf32>
    %140 = arith.addf %138, %139 : vector<16x16xf32>
    %141 = vector.extract_strided_slice %108 {offsets = [0, 0], sizes = [16, 16], strides = [1, 1]} : vector<16x64xf32> to vector<16x16xf32>
    %142 = arith.mulf %140, %141 : vector<16x16xf32>
    %cst_50 = arith.constant dense<0.000000e+00> : vector<16xf32>
    %143 = vector.multi_reduction <add>, %142, %cst_50 [1] : vector<16x16xf32> to vector<16xf32>
    %144 = vector.shape_cast %143 : vector<16xf32> to vector<16x1xf32>
    %145 = arith.addf %110, %144 : vector<16x1xf32>
    %146 = vector.extract_strided_slice %104 {offsets = [16, 0], sizes = [16, 48], strides = [1, 1]} : vector<64x48xf32> to vector<16x48xf32>
    %cst_51 = arith.constant dense<0.000000e+00> : vector<16x48xf32>
    %147 = tpu.matmul %140, %105, %cst_51 {dimension_numbers = #tpu.dot_dimension_numbers<[1], [0], [0], [1], [0, 0, 1, 1], [], []>} : vector<16x16xf32>, vector<16x48xf32>, vector<16x48xf32> -> vector<16x48xf32>
    %148 = vector.broadcast %106 : vector<1x48xf32> to vector<16x48xf32>
    %149 = arith.addf %147, %148 : vector<16x48xf32>
    %150 = vector.extract_strided_slice %146 {offsets = [0, 0], sizes = [16, 16], strides = [1, 1]} : vector<16x48xf32> to vector<16x16xf32>
    %151 = vector.extract_strided_slice %149 {offsets = [0, 0], sizes = [16, 16], strides = [1, 1]} : vector<16x48xf32> to vector<16x16xf32>
    %152 = arith.addf %150, %151 : vector<16x16xf32>
    %153 = arith.negf %152 : vector<16x16xf32>
    %154 = math.exp %153 : vector<16x16xf32>
    %cst_52 = arith.constant 1.000000e+00 : f32
    %155 = vector.broadcast %cst_52 : f32 to vector<16x16xf32>
    %156 = arith.addf %155, %154 : vector<16x16xf32>
    %157 = arith.divf %155, %156 : vector<16x16xf32>
    %158 = vector.extract_strided_slice %146 {offsets = [0, 16], sizes = [16, 16], strides = [1, 1]} : vector<16x48xf32> to vector<16x16xf32>
    %159 = vector.extract_strided_slice %149 {offsets = [0, 16], sizes = [16, 16], strides = [1, 1]} : vector<16x48xf32> to vector<16x16xf32>
    %160 = arith.addf %158, %159 : vector<16x16xf32>
    %161 = arith.negf %160 : vector<16x16xf32>
    %162 = math.exp %161 : vector<16x16xf32>
    %cst_53 = arith.constant 1.000000e+00 : f32
    %163 = vector.broadcast %cst_53 : f32 to vector<16x16xf32>
    %164 = arith.addf %163, %162 : vector<16x16xf32>
    %165 = arith.divf %163, %164 : vector<16x16xf32>
    %166 = vector.extract_strided_slice %146 {offsets = [0, 32], sizes = [16, 16], strides = [1, 1]} : vector<16x48xf32> to vector<16x16xf32>
    %167 = vector.extract_strided_slice %149 {offsets = [0, 32], sizes = [16, 16], strides = [1, 1]} : vector<16x48xf32> to vector<16x16xf32>
    %168 = arith.mulf %157, %167 : vector<16x16xf32>
    %169 = arith.addf %166, %168 : vector<16x16xf32>
    %170 = math.tanh %169 : vector<16x16xf32>
    %cst_54 = arith.constant 1.000000e+00 : f32
    %171 = vector.broadcast %cst_54 : f32 to vector<16x16xf32>
    %172 = arith.subf %171, %165 : vector<16x16xf32>
    %173 = arith.mulf %172, %170 : vector<16x16xf32>
    %174 = arith.mulf %165, %140 : vector<16x16xf32>
    %175 = arith.addf %173, %174 : vector<16x16xf32>
    %176 = vector.extract_strided_slice %108 {offsets = [0, 16], sizes = [16, 16], strides = [1, 1]} : vector<16x64xf32> to vector<16x16xf32>
    %177 = arith.mulf %175, %176 : vector<16x16xf32>
    %cst_55 = arith.constant dense<0.000000e+00> : vector<16xf32>
    %178 = vector.multi_reduction <add>, %177, %cst_55 [1] : vector<16x16xf32> to vector<16xf32>
    %179 = vector.shape_cast %178 : vector<16xf32> to vector<16x1xf32>
    %180 = arith.addf %145, %179 : vector<16x1xf32>
    %181 = vector.extract_strided_slice %104 {offsets = [32, 0], sizes = [16, 48], strides = [1, 1]} : vector<64x48xf32> to vector<16x48xf32>
    %cst_56 = arith.constant dense<0.000000e+00> : vector<16x48xf32>
    %182 = tpu.matmul %175, %105, %cst_56 {dimension_numbers = #tpu.dot_dimension_numbers<[1], [0], [0], [1], [0, 0, 1, 1], [], []>} : vector<16x16xf32>, vector<16x48xf32>, vector<16x48xf32> -> vector<16x48xf32>
    %183 = vector.broadcast %106 : vector<1x48xf32> to vector<16x48xf32>
    %184 = arith.addf %182, %183 : vector<16x48xf32>
    %185 = vector.extract_strided_slice %181 {offsets = [0, 0], sizes = [16, 16], strides = [1, 1]} : vector<16x48xf32> to vector<16x16xf32>
    %186 = vector.extract_strided_slice %184 {offsets = [0, 0], sizes = [16, 16], strides = [1, 1]} : vector<16x48xf32> to vector<16x16xf32>
    %187 = arith.addf %185, %186 : vector<16x16xf32>
    %188 = arith.negf %187 : vector<16x16xf32>
    %189 = math.exp %188 : vector<16x16xf32>
    %cst_57 = arith.constant 1.000000e+00 : f32
    %190 = vector.broadcast %cst_57 : f32 to vector<16x16xf32>
    %191 = arith.addf %190, %189 : vector<16x16xf32>
    %192 = arith.divf %190, %191 : vector<16x16xf32>
    %193 = vector.extract_strided_slice %181 {offsets = [0, 16], sizes = [16, 16], strides = [1, 1]} : vector<16x48xf32> to vector<16x16xf32>
    %194 = vector.extract_strided_slice %184 {offsets = [0, 16], sizes = [16, 16], strides = [1, 1]} : vector<16x48xf32> to vector<16x16xf32>
    %195 = arith.addf %193, %194 : vector<16x16xf32>
    %196 = arith.negf %195 : vector<16x16xf32>
    %197 = math.exp %196 : vector<16x16xf32>
    %cst_58 = arith.constant 1.000000e+00 : f32
    %198 = vector.broadcast %cst_58 : f32 to vector<16x16xf32>
    %199 = arith.addf %198, %197 : vector<16x16xf32>
    %200 = arith.divf %198, %199 : vector<16x16xf32>
    %201 = vector.extract_strided_slice %181 {offsets = [0, 32], sizes = [16, 16], strides = [1, 1]} : vector<16x48xf32> to vector<16x16xf32>
    %202 = vector.extract_strided_slice %184 {offsets = [0, 32], sizes = [16, 16], strides = [1, 1]} : vector<16x48xf32> to vector<16x16xf32>
    %203 = arith.mulf %192, %202 : vector<16x16xf32>
    %204 = arith.addf %201, %203 : vector<16x16xf32>
    %205 = math.tanh %204 : vector<16x16xf32>
    %cst_59 = arith.constant 1.000000e+00 : f32
    %206 = vector.broadcast %cst_59 : f32 to vector<16x16xf32>
    %207 = arith.subf %206, %200 : vector<16x16xf32>
    %208 = arith.mulf %207, %205 : vector<16x16xf32>
    %209 = arith.mulf %200, %175 : vector<16x16xf32>
    %210 = arith.addf %208, %209 : vector<16x16xf32>
    %211 = vector.extract_strided_slice %108 {offsets = [0, 32], sizes = [16, 16], strides = [1, 1]} : vector<16x64xf32> to vector<16x16xf32>
    %212 = arith.mulf %210, %211 : vector<16x16xf32>
    %cst_60 = arith.constant dense<0.000000e+00> : vector<16xf32>
    %213 = vector.multi_reduction <add>, %212, %cst_60 [1] : vector<16x16xf32> to vector<16xf32>
    %214 = vector.shape_cast %213 : vector<16xf32> to vector<16x1xf32>
    %215 = arith.addf %180, %214 : vector<16x1xf32>
    %216 = vector.extract_strided_slice %104 {offsets = [48, 0], sizes = [16, 48], strides = [1, 1]} : vector<64x48xf32> to vector<16x48xf32>
    %cst_61 = arith.constant dense<0.000000e+00> : vector<16x48xf32>
    %217 = tpu.matmul %210, %105, %cst_61 {dimension_numbers = #tpu.dot_dimension_numbers<[1], [0], [0], [1], [0, 0, 1, 1], [], []>} : vector<16x16xf32>, vector<16x48xf32>, vector<16x48xf32> -> vector<16x48xf32>
    %218 = vector.broadcast %106 : vector<1x48xf32> to vector<16x48xf32>
    %219 = arith.addf %217, %218 : vector<16x48xf32>
    %220 = vector.extract_strided_slice %216 {offsets = [0, 0], sizes = [16, 16], strides = [1, 1]} : vector<16x48xf32> to vector<16x16xf32>
    %221 = vector.extract_strided_slice %219 {offsets = [0, 0], sizes = [16, 16], strides = [1, 1]} : vector<16x48xf32> to vector<16x16xf32>
    %222 = arith.addf %220, %221 : vector<16x16xf32>
    %223 = arith.negf %222 : vector<16x16xf32>
    %224 = math.exp %223 : vector<16x16xf32>
    %cst_62 = arith.constant 1.000000e+00 : f32
    %225 = vector.broadcast %cst_62 : f32 to vector<16x16xf32>
    %226 = arith.addf %225, %224 : vector<16x16xf32>
    %227 = arith.divf %225, %226 : vector<16x16xf32>
    %228 = vector.extract_strided_slice %216 {offsets = [0, 16], sizes = [16, 16], strides = [1, 1]} : vector<16x48xf32> to vector<16x16xf32>
    %229 = vector.extract_strided_slice %219 {offsets = [0, 16], sizes = [16, 16], strides = [1, 1]} : vector<16x48xf32> to vector<16x16xf32>
    %230 = arith.addf %228, %229 : vector<16x16xf32>
    %231 = arith.negf %230 : vector<16x16xf32>
    %232 = math.exp %231 : vector<16x16xf32>
    %cst_63 = arith.constant 1.000000e+00 : f32
    %233 = vector.broadcast %cst_63 : f32 to vector<16x16xf32>
    %234 = arith.addf %233, %232 : vector<16x16xf32>
    %235 = arith.divf %233, %234 : vector<16x16xf32>
    %236 = vector.extract_strided_slice %216 {offsets = [0, 32], sizes = [16, 16], strides = [1, 1]} : vector<16x48xf32> to vector<16x16xf32>
    %237 = vector.extract_strided_slice %219 {offsets = [0, 32], sizes = [16, 16], strides = [1, 1]} : vector<16x48xf32> to vector<16x16xf32>
    %238 = arith.mulf %227, %237 : vector<16x16xf32>
    %239 = arith.addf %236, %238 : vector<16x16xf32>
    %240 = math.tanh %239 : vector<16x16xf32>
    %cst_64 = arith.constant 1.000000e+00 : f32
    %241 = vector.broadcast %cst_64 : f32 to vector<16x16xf32>
    %242 = arith.subf %241, %235 : vector<16x16xf32>
    %243 = arith.mulf %242, %240 : vector<16x16xf32>
    %244 = arith.mulf %235, %210 : vector<16x16xf32>
    %245 = arith.addf %243, %244 : vector<16x16xf32>
    %246 = vector.extract_strided_slice %108 {offsets = [0, 48], sizes = [16, 16], strides = [1, 1]} : vector<16x64xf32> to vector<16x16xf32>
    %247 = arith.mulf %245, %246 : vector<16x16xf32>
    %cst_65 = arith.constant dense<0.000000e+00> : vector<16xf32>
    %248 = vector.multi_reduction <add>, %247, %cst_65 [1] : vector<16x16xf32> to vector<16xf32>
    %249 = vector.shape_cast %248 : vector<16xf32> to vector<16x1xf32>
    %250 = arith.addf %215, %249 : vector<16x1xf32>
    %251 = tpu.iota {dimensions = array<i32: 0>} : vector<2x16xi32>
    %252 = tpu.iota {dimensions = array<i32: 1>} : vector<2x16xi32>
    %c3_i32_66 = arith.constant 3 : i32
    %253 = vector.broadcast %c3_i32_66 : i32 to vector<2x16xi32>
    %254 = arith.shrsi %252, %253 : vector<2x16xi32>
    %255 = arith.cmpi eq, %254, %251 : vector<2x16xi32>
    %256 = arith.extui %255 : vector<2x16xi1> to vector<2x16xi32>
    %257 = arith.sitofp %256 : vector<2x16xi32> to vector<2x16xf32>
    %cst_67 = arith.constant dense<0.000000e+00> : vector<2x1xf32>
    %258 = tpu.matmul %257, %250, %cst_67 {dimension_numbers = #tpu.dot_dimension_numbers<[1], [0], [0], [1], [0, 0, 1, 1], [], []>} : vector<2x16xf32>, vector<16x1xf32>, vector<2x1xf32> -> vector<2x1xf32>
    %c0_68 = arith.constant 0 : index
    %c0_69 = arith.constant 0 : index
    %259 = vector.load %arg7[%c0_68, %c0_69] : memref<1x1xf32, #tpu.memory_space<vmem>>, vector<1x1xf32>
    %260 = vector.broadcast %259 : vector<1x1xf32> to vector<2x1xf32>
    %261 = arith.addf %258, %260 : vector<2x1xf32>
    %c0_70 = arith.constant 0 : index
    %c0_71 = arith.constant 0 : index
    %262 = vector.load %arg8[%c0_70, %c0_71] : memref<2x1xf32, #tpu.memory_space<vmem>>, vector<2x1xf32>
    tpu.vector_store %arg8[%c0_70, %c0_71], %261 {strides = array<i32>} : memref<2x1xf32, #tpu.memory_space<vmem>>, vector<2x1xf32>,
    return
  }
}

</mosaic_0001>

<llo_original>
// kernel: stgnn_forward.1
$region0: #{stgnn_forward.1}
  #allocation0 [shape = 'u32[]', space=smem, size = 0x4, offset = 0x4, fixed_abs, tag = 'smem constant byte address 0x4 - core index']
  #allocation1 [shape = 'u32[144,128]{1,0:T(1,128)}', space=vmem, size = 0x12000, scoped, tag = 'internal scratch']
  #allocation2 [shape = 'f32[1,1]{1,0:T(1,128)S(1)}', space=vmem, size = 0x200, scoped, tag = 'scoped memory for stgnn_forward.1']
  %s0 = inlined_call_operand.hbm [shape: f32[16,32], index: 0, kind: input, shape index: {}]
  %s1 = inlined_call_operand.hbm [shape: f32[3,8,16], index: 1, kind: input, shape index: {}]
  %s2 = inlined_call_operand.hbm [shape: f32[16,48], index: 2, kind: input, shape index: {}]
  %s3 = inlined_call_operand.hbm [shape: f32[16,48], index: 3, kind: input, shape index: {}]
  %s4 = inlined_call_operand.vmem [shape: f32[1,48], index: 4, kind: input, shape index: {}]
  %s5 = inlined_call_operand.hbm [shape: f32[1,48], index: 5, kind: input, shape index: {}]
  %s6 = inlined_call_operand.vmem [shape: f32[8,64], index: 6, kind: input, shape index: {}]
  %s7 = inlined_call_operand.<no memory space> [shape: f32[1,1], index: 7, kind: input, shape index: {}]
  %s8 = inlined_call_operand.vmem [shape: f32[2,1], index: 8, kind: output, shape index: {}]
  %s9 = sld [smem:[#allocation0]]
  $region62: #{stgnn_forward.1} parent=0
    _
  %s11 = ssub.s32 1, %s9
  %s12 = scalar_select 0, %s11, %s9
  %v13 = vstv %s7
  %14 = vst [vmem:[#allocation2] sm:$0x1] %v13
  $region1: #{stgnn_forward.1} parent=0
    #allocation3 [shape = 'u8[8192]{0}', space=vmem, size = 0x2000, scoped, tag = 'input window, operand 0, single buffered']
    #allocation4 [shape = 's32[1]{0}', space=sflag, size = 0x4, scoped, tag = 'scoped memory for stgnn_forward.1']
    #allocation5 [shape = 'u8[12288]{0}', space=vmem, size = 0x3000, scoped, tag = 'input window, operand 1, single buffered']
    #allocation6 [shape = 's32[1]{0}', space=sflag, size = 0x4, scoped, tag = 'scoped memory for stgnn_forward.1']
    #allocation7 [shape = 'u8[8192]{0}', space=vmem, size = 0x2000, scoped, tag = 'input window, operand 2, single buffered']
    #allocation8 [shape = 'u8[8192]{0}', space=vmem, size = 0x2000, scoped, tag = 'input window, operand 3, single buffered']
    #allocation9 [shape = 's32[1]{0}', space=sflag, size = 0x4, scoped, tag = 'scoped memory for stgnn_forward.1']
    #allocation10 [shape = 'u8[512]{0}', space=vmem, size = 0x400, scoped, tag = 'input window, operand 5, single buffered']
    %15 = vsyncpa [#allocation4], 0
    %16 = vsyncpa [#allocation6], 0
    %17 = vsyncpa [#allocation9], 0
    // Predicated region
    $region2: #{stgnn_forward.1} parent=1 // pred_check
      _
    $region3: #{stgnn_forward.1} parent=1 // pred_check_branch
      %19 = sbr.rel (0) target = $region5
    $region4: #{stgnn_forward.1} parent=1 // pred_region
      %s21 = ssub.s32 256, 256
      %22 = vsyncadd [#allocation4], %s21
      %s23 = sshll.u32 [#allocation3], 4
      %s24 = int_to_ptr.vmem [resolvable:$true] %s23
      %29 = dma.hbm_to_vmem [thread:$0]  %s0, 256, %s24, [#allocation4], 128, 128, 8
    $region5: #{stgnn_forward.1} parent=1 // pred_fallthru
      _
    // Predicated region
    $region6: #{stgnn_forward.1} parent=1 // pred_check
      _
    $region7: #{stgnn_forward.1} parent=1 // pred_check_branch
      %31 = sbr.rel (0) target = $region9
    $region8: #{stgnn_forward.1} parent=1 // pred_region
      %s33 = ssub.s32 384, 384
      %34 = vsyncadd [#allocation6], %s33
      %s35 = sshll.u32 [#allocation5], 4
      %s36 = int_to_ptr.vmem [resolvable:$true] %s35
      %41 = dma.hbm_to_vmem [thread:$0]  %s1, 384, %s36, [#allocation6], 128, 128, 8
    $region9: #{stgnn_forward.1} parent=1 // pred_fallthru
      _
    // Predicated region
    $region10: #{stgnn_forward.1} parent=1 // pred_check
      _
    $region11: #{stgnn_forward.1} parent=1 // pred_check_branch
      %43 = sbr.rel (0) target = $region13
    $region12: #{stgnn_forward.1} parent=1 // pred_region
      %s45 = ssub.s32 256, 256
      %46 = vsyncadd [#allocation6], %s45
      %s47 = sshll.u32 [#allocation7], 4
      %s48 = int_to_ptr.vmem [resolvable:$true] %s47
      %53 = dma.hbm_to_vmem [thread:$0]  %s2, 256, %s48, [#allocation6], 128, 128, 8
    $region13: #{stgnn_forward.1} parent=1 // pred_fallthru
      _
    // Predicated region
    $region14: #{stgnn_forward.1} parent=1 // pred_check
      _
    $region15: #{stgnn_forward.1} parent=1 // pred_check_branch
      %55 = sbr.rel (0) target = $region17
    $region16: #{stgnn_forward.1} parent=1 // pred_region
      %s57 = ssub.s32 256, 256
      %58 = vsyncadd [#allocation9], %s57
      %s59 = sshll.u32 [#allocation8], 4
      %s60 = int_to_ptr.vmem [resolvable:$true] %s59
      %65 = dma.hbm_to_vmem [thread:$0]  %s3, 256, %s60, [#allocation9], 128, 128, 8
    $region17: #{stgnn_forward.1} parent=1 // pred_fallthru
      _
    // Predicated region
    $region18: #{stgnn_forward.1} parent=1 // pred_check
      _
    $region19: #{stgnn_forward.1} parent=1 // pred_check_branch
      %67 = sbr.rel (0) target = $region21
    $region20: #{stgnn_forward.1} parent=1 // pred_region
      _
    $region21: #{stgnn_forward.1} parent=1 // pred_fallthru
      _
    // Predicated region
    $region22: #{stgnn_forward.1} parent=1 // pred_check
      _
    $region23: #{stgnn_forward.1} parent=1 // pred_check_branch
      %69 = sbr.rel (0) target = $region25
    $region24: #{stgnn_forward.1} parent=1 // pred_region
      %s71 = ssub.s32 16, 16
      %72 = vsyncadd [#allocation9], %s71
      %s74 = sshll.u32 [#allocation10], 4
      %s75 = int_to_ptr.vmem [resolvable:$true] %s74
      %77 = dma.hbm_to_vmem [thread:$0]  %s5, 16, %s75, [#allocation9]
    $region25: #{stgnn_forward.1} parent=1 // pred_fallthru
      _
    // Predicated region
    $region26: #{stgnn_forward.1} parent=1 // pred_check
      _
    $region27: #{stgnn_forward.1} parent=1 // pred_check_branch
      %79 = sbr.rel (0) target = $region29
    $region28: #{stgnn_forward.1} parent=1 // pred_region
      _
    $region29: #{stgnn_forward.1} parent=1 // pred_fallthru
      _
    // Predicated region
    $region30: #{stgnn_forward.1} parent=1 // pred_check
      _
    $region31: #{stgnn_forward.1} parent=1 // pred_check_branch
      %81 = sbr.rel (0) target = $region33
    $region32: #{stgnn_forward.1} parent=1 // pred_region
      _
    $region33: #{stgnn_forward.1} parent=1 // pred_fallthru
      _
    // Predicated region
    $region34: #{stgnn_forward.1} parent=1 // pred_check
      _
    $region35: #{stgnn_forward.1} parent=1 // pred_check_branch
      %83 = sbr.rel (0) target = $region37
    $region36: #{stgnn_forward.1} parent=1 // pred_region
      %84 = dma.done [#allocation4], 256
    $region37: #{stgnn_forward.1} parent=1 // pred_fallthru
      _
    // Predicated region
    $region38: #{stgnn_forward.1} parent=1 // pred_check
      _
    $region39: #{stgnn_forward.1} parent=1 // pred_check_branch
      %86 = sbr.rel (0) target = $region41
    $region40: #{stgnn_forward.1} parent=1 // pred_region
      %87 = dma.done [#allocation6], 384
    $region41: #{stgnn_forward.1} parent=1 // pred_fallthru
      _
    // Predicated region
    $region42: #{stgnn_forward.1} parent=1 // pred_check
      _
    $region43: #{stgnn_forward.1} parent=1 // pred_check_branch
      %89 = sbr.rel (0) target = $region45
    $region44: #{stgnn_forward.1} parent=1 // pred_region
      %90 = dma.done [#allocation6], 256
    $region45: #{stgnn_forward.1} parent=1 // pred_fallthru
      _
    // Predicated region
    $region46: #{stgnn_forward.1} parent=1 // pred_check
      _
    $region47: #{stgnn_forward.1} parent=1 // pred_check_branch
      %92 = sbr.rel (0) target = $region49
    $region48: #{stgnn_forward.1} parent=1 // pred_region
      %93 = dma.done [#allocation9], 256
    $region49: #{stgnn_forward.1} parent=1 // pred_fallthru
      _
    // Predicated region
    $region50: #{stgnn_forward.1} parent=1 // pred_check
      _
    $region51: #{stgnn_forward.1} parent=1 // pred_check_branch
      %95 = sbr.rel (0) target = $region53
    $region52: #{stgnn_forward.1} parent=1 // pred_region
      %96 = dma.done [#allocation9], 16
    $region53: #{stgnn_forward.1} parent=1 // pred_fallthru
      _
    %v97 = vld [vmem:[#allocation3] sm:$0xff]
    %v98 = vld [vmem:[#allocation3 + $0x8] sm:$0xff]
    %100 = vrot.lane.b32.xlu0 %v97, 120
    %v101 = vpop.permute.xlu0 %100
    %104 = vrot.lane.b32.xlu0 %v98, 120
    %v105 = vpop.permute.xlu0 %104
    %107 = vrot.lane.b32.xlu0 %v97, 112
    %v108 = vpop.permute.xlu0 %107
    %110 = vrot.lane.b32.xlu0 %v98, 112
    %v111 = vpop.permute.xlu0 %110
    %113 = vrot.lane.b32.xlu0 %v97, 104
    %v114 = vpop.permute.xlu0 %113
    %116 = vrot.lane.b32.xlu0 %v98, 104
    %v117 = vpop.permute.xlu0 %116
    %v119 = vmul.f32 %v97, %v97
    %v120 = vmul.f32 %v98, %v98
    %v121 = vmul.f32 %v101, %v101
    %v122 = vmul.f32 %v105, %v105
    %v123 = vmul.f32 %v108, %v108
    %v124 = vmul.f32 %v111, %v111
    %v125 = vmul.f32 %v114, %v114
    %v126 = vmul.f32 %v117, %v117
    %vm127 = vcmask 64512
    %v128 = vsel %vm127, %v119, 0.0
    %129 = vadd.xlane.f32.xlu0 %v128
    %v130 = vpop.xlane.xlu0 %129
    %v131 = vsel %vm127, %v120, 0.0
    %132 = vadd.xlane.f32.xlu0 %v131
    %v133 = vpop.xlane.xlu0 %132
    %v134 = vsel %vm127, %v121, 0.0
    %135 = vadd.xlane.f32.xlu0 %v134
    %v136 = vpop.xlane.xlu0 %135
    %v137 = vsel %vm127, %v122, 0.0
    %138 = vadd.xlane.f32.xlu0 %v137
    %v139 = vpop.xlane.xlu0 %138
    %v140 = vsel %vm127, %v123, 0.0
    %141 = vadd.xlane.f32.xlu0 %v140
    %v142 = vpop.xlane.xlu0 %141
    %v143 = vsel %vm127, %v124, 0.0
    %144 = vadd.xlane.f32.xlu0 %v143
    %v145 = vpop.xlane.xlu0 %144
    %v146 = vsel %vm127, %v125, 0.0
    %147 = vadd.xlane.f32.xlu0 %v146
    %v148 = vpop.xlane.xlu0 %147
    %v149 = vsel %vm127, %v126, 0.0
    %150 = vadd.xlane.f32.xlu0 %v149
    %v151 = vpop.xlane.xlu0 %150
    %v152 = vsel %vm127, %v97, 0
    %v154 = vsel %vm127, %v98, 0
    %v156 = vsel %vm127, %v101, 0
    %v158 = vsel %vm127, %v105, 0
    %v160 = vsel %vm127, %v108, 0
    %v162 = vsel %vm127, %v111, 0
    %v164 = vsel %vm127, %v114, 0
    %v166 = vsel %vm127, %v117, 0
    %168 = vmatprep.subr.mxu0 0.0
    %169 = vmatpush1.xpose.msra.mxu0 0.0
    %170 = vmatprep.subr.mxu0 0.0
    %171 = vmatpush1.xpose.msra.mxu0 0.0
    %172 = vmatprep.subr.mxu0 0.0
    %173 = vmatpush1.xpose.msra.mxu0 0.0
    %174 = vmatprep.subr.mxu0 0.0
    %175 = vmatpush1.xpose.msra.mxu0 0.0
    %176 = vmatprep.subr.mxu0 0.0
    %177 = vmatpush1.xpose.msra.mxu0 0.0
    %178 = vmatprep.subr.mxu0 0.0
    %179 = vmatpush1.xpose.msra.mxu0 0.0
    %180 = vmatprep.subr.mxu0 0.0
    %181 = vmatpush1.xpose.msra.mxu0 0.0
    %182 = vmatprep.subr.mxu0 0.0
    %183 = vmatpush1.xpose.msra.mxu0 0.0
    %184 = vmatprep.subr.mxu0 0.0
    %185 = vmatpush1.xpose.msra.mxu0 %v166
    %186 = vmatprep.subr.mxu0 0.0
    %187 = vmatpush1.xpose.msra.mxu0 %v164
    %188 = vmatprep.subr.mxu0 0.0
    %189 = vmatpush1.xpose.msra.mxu0 %v162
    %190 = vmatprep.subr.mxu0 0.0
    %191 = vmatpush1.xpose.msra.mxu0 %v160
    %192 = vmatprep.subr.mxu0 0.0
    %193 = vmatpush1.xpose.msra.mxu0 %v158
    %194 = vmatprep.subr.mxu0 0.0
    %195 = vmatpush1.xpose.msra.mxu0 %v156
    %196 = vmatprep.subr.mxu0 0.0
    %197 = vmatpush1.xpose.msra.mxu0 %v154
    %198 = vmatprep.subr.mxu0 0.0
    %199 = vmatpush1.xpose.msra.mxu0 %v152
    %200 = vmatprep.subr.mxu0 0.0
    %201 = vmatpush2.xpose.msra.mxu0 0.0
    %202 = vmatprep.subr.mxu0 0.0
    %203 = vmatpush2.xpose.msra.mxu0 0.0
    %204 = vmatprep.subr.mxu0 0.0
    %205 = vmatpush2.xpose.msra.mxu0 0.0
    %206 = vmatprep.subr.mxu0 0.0
    %207 = vmatpush2.xpose.msra.mxu0 0.0
    %208 = vmatprep.subr.mxu0 0.0
    %209 = vmatpush2.xpose.msra.mxu0 0.0
    %210 = vmatprep.subr.mxu0 0.0
    %211 = vmatpush2.xpose.msra.mxu0 0.0
    %212 = vmatprep.subr.mxu0 0.0
    %213 = vmatpush2.xpose.msra.mxu0 0.0
    %214 = vmatprep.subr.mxu0 0.0
    %215 = vmatpush2.xpose.msra.mxu0 0.0
    %216 = vmatprep.subr.mxu0 0.0
    %217 = vmatpush2.xpose.msra.mxu0 0.0
    %218 = vmatprep.subr.mxu0 0.0
    %219 = vmatpush2.xpose.msra.mxu0 0.0
    %220 = vmatprep.subr.mxu0 0.0
    %221 = vmatpush2.xpose.msra.mxu0 0.0
    %222 = vmatprep.subr.mxu0 0.0
    %223 = vmatpush2.xpose.msra.mxu0 0.0
    %224 = vmatprep.subr.mxu0 0.0
    %225 = vmatpush2.xpose.msra.mxu0 0.0
    %226 = vmatprep.subr.mxu0 0.0
    %227 = vmatpush2.xpose.msra.mxu0 0.0
    %228 = vmatprep.subr.mxu0 0.0
    %229 = vmatpush2.xpose.msra.mxu0 0.0
    %230 = vmatprep.subr.mxu0 0.0
    %231 = vmatpush2.xpose.msra.mxu0 0.0
    %232 = vmatprep.mubr.f32.mxu0 0.0
    %233 = vmatmul.mubr.f32.gmra.mxu0 %v152
    %v234 = vpop.f32.mrf.mxu0
    %v235 = vadd.f32 0.0, %v234
    %v236 = vpop.f32.mrf.mxu0
    %237 = vmatprep.mubr.f32.mxu0 0.0
    %238 = vmatmul.mubr.f32.gmra.mxu0 %v154
    %v239 = vpop.f32.mrf.mxu0
    %v240 = vadd.f32 0.0, %v239
    %v241 = vpop.f32.mrf.mxu0
    %242 = vmatprep.mubr.f32.mxu0 0.0
    %243 = vmatmul.mubr.f32.gmra.mxu0 %v156
    %v244 = vpop.f32.mrf.mxu0
    %v245 = vadd.f32 0.0, %v244
    %v246 = vpop.f32.mrf.mxu0
    %247 = vmatprep.mubr.f32.mxu0 0.0
    %248 = vmatmul.mubr.f32.gmra.mxu0 %v158
    %v249 = vpop.f32.mrf.mxu0
    %v250 = vadd.f32 0.0, %v249
    %v251 = vpop.f32.mrf.mxu0
    %252 = vmatprep.mubr.f32.mxu0 0.0
    %253 = vmatmul.mubr.f32.gmra.mxu0 %v160
    %v254 = vpop.f32.mrf.mxu0
    %v255 = vadd.f32 0.0, %v254
    %v256 = vpop.f32.mrf.mxu0
    %257 = vmatprep.mubr.f32.mxu0 0.0
    %258 = vmatmul.mubr.f32.gmra.mxu0 %v162
    %v259 = vpop.f32.mrf.mxu0
    %v260 = vadd.f32 0.0, %v259
    %v261 = vpop.f32.mrf.mxu0
    %262 = vmatprep.mubr.f32.mxu0 0.0
    %263 = vmatmul.mubr.f32.gmra.mxu0 %v164
    %v264 = vpop.f32.mrf.mxu0
    %v265 = vadd.f32 0.0, %v264
    %v266 = vpop.f32.mrf.mxu0
    %267 = vmatprep.mubr.f32.mxu0 0.0
    %268 = vmatmul.mubr.f32.gmra.mxu0 %v166
    %v269 = vpop.f32.mrf.mxu0
    %v270 = vadd.f32 0.0, %v269
    %v271 = vpop.f32.mrf.mxu0
    %272 = vdwg.mxu0
    %273 = vxpose.xlu0.b32.start [1/16] %v130, 128
    %274 = vxpose.xlu0.b32.cont [2/16] %v133, 128
    %275 = vxpose.xlu0.b32.cont [3/16] %v136, 128
    %276 = vxpose.xlu0.b32.cont [4/16] %v139, 128
    %277 = vxpose.xlu0.b32.cont [5/16] %v142, 128
    %278 = vxpose.xlu0.b32.cont [6/16] %v145, 128
    %279 = vxpose.xlu0.b32.cont [7/16] %v148, 128
    %280 = vxpose.xlu0.b32.cont [8/16] %v151, 128
    %281 = vxpose.xlu0.b32.cont [9/16] 0.0, 128
    %282 = vxpose.xlu0.b32.cont [10/16] 0.0, 128
    %283 = vxpose.xlu0.b32.cont [11/16] 0.0, 128
    %284 = vxpose.xlu0.b32.cont [12/16] 0.0, 128
    %285 = vxpose.xlu0.b32.cont [13/16] 0.0, 128
    %286 = vxpose.xlu0.b32.cont [14/16] 0.0, 128
    %287 = vxpose.xlu0.b32.cont [15/16] 0.0, 128
    %288 = vxpose.xlu0.b32.end [16/16] 0.0, 128
    %v289 = vpop.trf.xlu0
    %v290 = vpop.trf.xlu0
    %v291 = vpop.trf.xlu0
    %v292 = vpop.trf.xlu0
    %v293 = vpop.trf.xlu0
    %v294 = vpop.trf.xlu0
    %v295 = vpop.trf.xlu0
    %v296 = vpop.trf.xlu0
    %v297 = vpop.trf.xlu0
    %v298 = vpop.trf.xlu0
    %v299 = vpop.trf.xlu0
    %v300 = vpop.trf.xlu0
    %v301 = vpop.trf.xlu0
    %v302 = vpop.trf.xlu0
    %v303 = vpop.trf.xlu0
    %v304 = vpop.trf.xlu0
    %v305 = vlaneseq
    %v306 = vshrl.u32 %v305, 7
    %v307 = vsub.s32 0, %v306
    %v308 = vrot.slane %v289, %v307
    %v309 = vadd.f32 %v130, %v308
    %v310 = vadd.f32 %v133, %v308
    %v311 = vadd.f32 %v136, %v308
    %v312 = vadd.f32 %v139, %v308
    %v313 = vadd.f32 %v142, %v308
    %v314 = vadd.f32 %v145, %v308
    %v315 = vadd.f32 %v148, %v308
    %v316 = vadd.f32 %v151, %v308
    %v317 = vmul.f32 %v235, 2.0
    %v318 = vmul.f32 %v240, 2.0
    %v319 = vmul.f32 %v245, 2.0
    %v320 = vmul.f32 %v250, 2.0
    %v321 = vmul.f32 %v255, 2.0
    %v322 = vmul.f32 %v260, 2.0
    %v323 = vmul.f32 %v265, 2.0
    %v324 = vmul.f32 %v270, 2.0
    %v325 = vsub.f32 %v309, %v317
    %v326 = vsub.f32 %v310, %v318
    %v327 = vsub.f32 %v311, %v319
    %v328 = vsub.f32 %v312, %v320
    %v329 = vsub.f32 %v313, %v321
    %v330 = vsub.f32 %v314, %v322
    %v331 = vsub.f32 %v315, %v323
    %v332 = vsub.f32 %v316, %v324
    %v333 = vmax.f32 %v325, 0.0
    %v334 = vmax.f32 %v326, 0.0
    %v335 = vmax.f32 %v327, 0.0
    %v336 = vmax.f32 %v328, 0.0
    %v337 = vmax.f32 %v329, 0.0
    %v338 = vmax.f32 %v330, 0.0
    %v339 = vmax.f32 %v331, 0.0
    %v340 = vmax.f32 %v332, 0.0
    %v341 = vsub.f32 0.0, %v333
    %v342 = vsub.f32 0.0, %v334
    %v343 = vsub.f32 0.0, %v335
    %v344 = vsub.f32 0.0, %v336
    %v345 = vsub.f32 0.0, %v337
    %v346 = vsub.f32 0.0, %v338
    %v347 = vsub.f32 0.0, %v339
    %v348 = vsub.f32 0.0, %v340
    %v349 = vmul.f32 %v341, 1.442695
    %v350 = vpow.pop %v349
    %v351 = vmul.f32 %v342, 1.442695
    %v352 = vpow.pop %v351
    %v353 = vmul.f32 %v343, 1.442695
    %v354 = vpow.pop %v353
    %v355 = vmul.f32 %v344, 1.442695
    %v356 = vpow.pop %v355
    %v357 = vmul.f32 %v345, 1.442695
    %v358 = vpow.pop %v357
    %v359 = vmul.f32 %v346, 1.442695
    %v360 = vpow.pop %v359
    %v361 = vmul.f32 %v347, 1.442695
    %v362 = vpow.pop %v361
    %v363 = vmul.f32 %v348, 1.442695
    %v364 = vpow.pop %v363
    %v365 = vlaneseq
    %v366 = vshrl.u32 %v365, 7
    %v367 = vadd.s32 %v366, 8
    %v368 = vadd.s32 %v366, 16
    %v369 = vadd.s32 %v366, 24
    %v370 = vadd.s32 %v366, 32
    %v371 = vadd.s32 %v366, 40
    %v372 = vadd.s32 %v366, 48
    %v373 = vadd.s32 %v366, 56
    %v374 = vlaneseq
    %v375 = vand.u32 %v374, 127
    %v376 = vshra.s32 %v366, 3
    %v377 = vshra.s32 %v367, 3
    %v378 = vshra.s32 %v368, 3
    %v379 = vshra.s32 %v369, 3
    %v380 = vshra.s32 %v370, 3
    %v381 = vshra.s32 %v371, 3
    %v382 = vshra.s32 %v372, 3
    %v383 = vshra.s32 %v373, 3
    %v384 = vshra.s32 %v375, 3
    %vm385 = vcmp.eq.s32.totalorder %v376, %v384
    %vm386 = vcmp.eq.s32.totalorder %v377, %v384
    %vm387 = vcmp.eq.s32.totalorder %v378, %v384
    %vm388 = vcmp.eq.s32.totalorder %v379, %v384
    %vm389 = vcmp.eq.s32.totalorder %v380, %v384
    %vm390 = vcmp.eq.s32.totalorder %v381, %v384
    %vm391 = vcmp.eq.s32.totalorder %v382, %v384
    %vm392 = vcmp.eq.s32.totalorder %v383, %v384
    %v393 = vsel %vm385, %v350, 0.0
    %v394 = vsel %vm386, %v352, 0.0
    %v395 = vsel %vm387, %v354, 0.0
    %v396 = vsel %vm388, %v356, 0.0
    %v397 = vsel %vm389, %v358, 0.0
    %v398 = vsel %vm390, %v360, 0.0
    %v399 = vsel %vm391, %v362, 0.0
    %v400 = vsel %vm392, %v364, 0.0
    %vm401 = vcmask 523264
    %v402 = vsel %vm401, %v393, -inf
    %403 = vmax.xlane.f32.xlu0 %v402
    %v404 = vpop.xlane.xlu0 %403
    %v405 = vsel %vm401, %v394, -inf
    %406 = vmax.xlane.f32.xlu0 %v405
    %v407 = vpop.xlane.xlu0 %406
    %v408 = vsel %vm401, %v395, -inf
    %409 = vmax.xlane.f32.xlu0 %v408
    %v410 = vpop.xlane.xlu0 %409
    %v411 = vsel %vm401, %v396, -inf
    %412 = vmax.xlane.f32.xlu0 %v411
    %v413 = vpop.xlane.xlu0 %412
    %v414 = vsel %vm401, %v397, -inf
    %415 = vmax.xlane.f32.xlu0 %v414
    %v416 = vpop.xlane.xlu0 %415
    %v417 = vsel %vm401, %v398, -inf
    %418 = vmax.xlane.f32.xlu0 %v417
    %v419 = vpop.xlane.xlu0 %418
    %v420 = vsel %vm401, %v399, -inf
    %421 = vmax.xlane.f32.xlu0 %v420
    %v422 = vpop.xlane.xlu0 %421
    %v423 = vsel %vm401, %v400, -inf
    %424 = vmax.xlane.f32.xlu0 %v423
    %v425 = vpop.xlane.xlu0 %424
    %vm426 = vcmp.eq.f32.partialorder %v393, %v404
    %vm427 = vcmp.eq.f32.partialorder %v394, %v407
    %vm428 = vcmp.eq.f32.partialorder %v395, %v410
    %vm429 = vcmp.eq.f32.partialorder %v396, %v413
    %vm430 = vcmp.eq.f32.partialorder %v397, %v416
    %vm431 = vcmp.eq.f32.partialorder %v398, %v419
    %vm432 = vcmp.eq.f32.partialorder %v399, %v422
    %vm433 = vcmp.eq.f32.partialorder %v400, %v425
    %v434 = vsel %vm426, %v375, 64
    %v435 = vsel %vm427, %v375, 64
    %v436 = vsel %vm428, %v375, 64
    %v437 = vsel %vm429, %v375, 64
    %v438 = vsel %vm430, %v375, 64
    %v439 = vsel %vm431, %v375, 64
    %v440 = vsel %vm432, %v375, 64
    %v441 = vsel %vm433, %v375, 64
    %v442 = vsel %vm401, %v434, 2147483647
    %v443 = vand.u32 %v442, 65535
    %v444 = vshra.s32 %v442, 16
    %v445 = vcvt.s32.f32 %v443
    %v446 = vcvt.s32.f32 %v444
    %447 = vmin.xlane.f32.xlu0 %v446
    %v448 = vpop.xlane.xlu0 %447
    %vm449 = vcmp.eq.f32.partialorder %v446, %v448
    %v450 = vsel %vm449, %v445, inf
    %451 = vmin.xlane.f32.xlu0 %v450
    %v452 = vpop.xlane.xlu0 %451
    %v453 = vcvt.f32.s32 %v452
    %v454 = vcvt.f32.s32 %v448
    %v455 = vshll.u32 %v454, 16
    %v456 = vadd.s32 %v455, %v453
    %v457 = vsel %vm401, %v435, 2147483647
    %v458 = vand.u32 %v457, 65535
    %v459 = vshra.s32 %v457, 16
    %v460 = vcvt.s32.f32 %v458
    %v461 = vcvt.s32.f32 %v459
    %462 = vmin.xlane.f32.xlu0 %v461
    %v463 = vpop.xlane.xlu0 %462
    %vm464 = vcmp.eq.f32.partialorder %v461, %v463
    %v465 = vsel %vm464, %v460, inf
    %466 = vmin.xlane.f32.xlu0 %v465
    %v467 = vpop.xlane.xlu0 %466
    %v468 = vcvt.f32.s32 %v467
    %v469 = vcvt.f32.s32 %v463
    %v470 = vshll.u32 %v469, 16
    %v471 = vadd.s32 %v470, %v468
    %v472 = vsel %vm401, %v436, 2147483647
    %v473 = vand.u32 %v472, 65535
    %v474 = vshra.s32 %v472, 16
    %v475 = vcvt.s32.f32 %v473
    %v476 = vcvt.s32.f32 %v474
    %477 = vmin.xlane.f32.xlu0 %v476
    %v478 = vpop.xlane.xlu0 %477
    %vm479 = vcmp.eq.f32.partialorder %v476, %v478
    %v480 = vsel %vm479, %v475, inf
    %481 = vmin.xlane.f32.xlu0 %v480
    %v482 = vpop.xlane.xlu0 %481
    %v483 = vcvt.f32.s32 %v482
    %v484 = vcvt.f32.s32 %v478
    %v485 = vshll.u32 %v484, 16
    %v486 = vadd.s32 %v485, %v483
    %v487 = vsel %vm401, %v437, 2147483647
    %v488 = vand.u32 %v487, 65535
    %v489 = vshra.s32 %v487, 16
    %v490 = vcvt.s32.f32 %v488
    %v491 = vcvt.s32.f32 %v489
    %492 = vmin.xlane.f32.xlu0 %v491
    %v493 = vpop.xlane.xlu0 %492
    %vm494 = vcmp.eq.f32.partialorder %v491, %v493
    %v495 = vsel %vm494, %v490, inf
    %496 = vmin.xlane.f32.xlu0 %v495
    %v497 = vpop.xlane.xlu0 %496
    %v498 = vcvt.f32.s32 %v497
    %v499 = vcvt.f32.s32 %v493
    %v500 = vshll.u32 %v499, 16
    %v501 = vadd.s32 %v500, %v498
    %v502 = vsel %vm401, %v438, 2147483647
    %v503 = vand.u32 %v502, 65535
    %v504 = vshra.s32 %v502, 16
    %v505 = vcvt.s32.f32 %v503
    %v506 = vcvt.s32.f32 %v504
    %507 = vmin.xlane.f32.xlu0 %v506
    %v508 = vpop.xlane.xlu0 %507
    %vm509 = vcmp.eq.f32.partialorder %v506, %v508
    %v510 = vsel %vm509, %v505, inf
    %511 = vmin.xlane.f32.xlu0 %v510
    %v512 = vpop.xlane.xlu0 %511
    %v513 = vcvt.f32.s32 %v512
    %v514 = vcvt.f32.s32 %v508
    %v515 = vshll.u32 %v514, 16
    %v516 = vadd.s32 %v515, %v513
    %v517 = vsel %vm401, %v439, 2147483647
    %v518 = vand.u32 %v517, 65535
    %v519 = vshra.s32 %v517, 16
    %v520 = vcvt.s32.f32 %v518
    %v521 = vcvt.s32.f32 %v519
    %522 = vmin.xlane.f32.xlu0 %v521
    %v523 = vpop.xlane.xlu0 %522
    %vm524 = vcmp.eq.f32.partialorder %v521, %v523
    %v525 = vsel %vm524, %v520, inf
    %526 = vmin.xlane.f32.xlu0 %v525
    %v527 = vpop.xlane.xlu0 %526
    %v528 = vcvt.f32.s32 %v527
    %v529 = vcvt.f32.s32 %v523
    %v530 = vshll.u32 %v529, 16
    %v531 = vadd.s32 %v530, %v528
    %v532 = vsel %vm401, %v440, 2147483647
    %v533 = vand.u32 %v532, 65535
    %v534 = vshra.s32 %v532, 16
    %v535 = vcvt.s32.f32 %v533
    %v536 = vcvt.s32.f32 %v534
    %537 = vmin.xlane.f32.xlu0 %v536
    %v538 = vpop.xlane.xlu0 %537
    %vm539 = vcmp.eq.f32.partialorder %v536, %v538
    %v540 = vsel %vm539, %v535, inf
    %541 = vmin.xlane.f32.xlu0 %v540
    %v542 = vpop.xlane.xlu0 %541
    %v543 = vcvt.f32.s32 %v542
    %v544 = vcvt.f32.s32 %v538
    %v545 = vshll.u32 %v544, 16
    %v546 = vadd.s32 %v545, %v543
    %v547 = vsel %vm401, %v441, 2147483647
    %v548 = vand.u32 %v547, 65535
    %v549 = vshra.s32 %v547, 16
    %v550 = vcvt.s32.f32 %v548
    %v551 = vcvt.s32.f32 %v549
    %552 = vmin.xlane.f32.xlu0 %v551
    %v553 = vpop.xlane.xlu0 %552
    %vm554 = vcmp.eq.f32.partialorder %v551, %v553
    %v555 = vsel %vm554, %v550, inf
    %556 = vmin.xlane.f32.xlu0 %v555
    %v557 = vpop.xlane.xlu0 %556
    %v558 = vcvt.f32.s32 %v557
    %v559 = vcvt.f32.s32 %v553
    %v560 = vshll.u32 %v559, 16
    %v561 = vadd.s32 %v560, %v558
    %vm562 = vcmp.eq.s32.totalorder %v375, %v456
    %vm563 = vcmp.eq.s32.totalorder %v375, %v471
    %vm564 = vcmp.eq.s32.totalorder %v375, %v486
    %vm565 = vcmp.eq.s32.totalorder %v375, %v501
    %vm566 = vcmp.eq.s32.totalorder %v375, %v516
    %vm567 = vcmp.eq.s32.totalorder %v375, %v531
    %vm568 = vcmp.eq.s32.totalorder %v375, %v546
    %vm569 = vcmp.eq.s32.totalorder %v375, %v561
    %v570 = vsel %vm562, 1, 0
    %v571 = vsel %vm563, 1, 0
    %v572 = vsel %vm564, 1, 0
    %v573 = vsel %vm565, 1, 0
    %v574 = vsel %vm566, 1, 0
    %v575 = vsel %vm567, 1, 0
    %v576 = vsel %vm568, 1, 0
    %v577 = vsel %vm569, 1, 0
    %v578 = vcvt.s32.f32 %v570
    %v579 = vcvt.s32.f32 %v571
    %v580 = vcvt.s32.f32 %v572
    %v581 = vcvt.s32.f32 %v573
    %v582 = vcvt.s32.f32 %v574
    %v583 = vcvt.s32.f32 %v575
    %v584 = vcvt.s32.f32 %v576
    %v585 = vcvt.s32.f32 %v577
    %v586 = vadd.f32 %v578, 0.0
    %v587 = vadd.f32 %v579, 0.0
    %v588 = vadd.f32 %v580, 0.0
    %v589 = vadd.f32 %v581, 0.0
    %v590 = vadd.f32 %v582, 0.0
    %v591 = vadd.f32 %v583, 0.0
    %v592 = vadd.f32 %v584, 0.0
    %v593 = vadd.f32 %v585, 0.0
    %vm594 = vcmp.gt.f32.partialorder %v578, 0.0
    %vm595 = vcmp.gt.f32.partialorder %v579, 0.0
    %vm596 = vcmp.gt.f32.partialorder %v580, 0.0
    %vm597 = vcmp.gt.f32.partialorder %v581, 0.0
    %vm598 = vcmp.gt.f32.partialorder %v582, 0.0
    %vm599 = vcmp.gt.f32.partialorder %v583, 0.0
    %vm600 = vcmp.gt.f32.partialorder %v584, 0.0
    %vm601 = vcmp.gt.f32.partialorder %v585, 0.0
    %v602 = vsel %vm594, -1.0, %v393
    %v603 = vsel %vm595, -1.0, %v394
    %v604 = vsel %vm596, -1.0, %v395
    %v605 = vsel %vm597, -1.0, %v396
    %v606 = vsel %vm598, -1.0, %v397
    %v607 = vsel %vm599, -1.0, %v398
    %v608 = vsel %vm600, -1.0, %v399
    %v609 = vsel %vm601, -1.0, %v400
    %v610 = vsel %vm401, %v602, -inf
    %611 = vmax.xlane.f32.xlu0 %v610
    %v612 = vpop.xlane.xlu0 %611
    %v613 = vsel %vm401, %v603, -inf
    %614 = vmax.xlane.f32.xlu0 %v613
    %v615 = vpop.xlane.xlu0 %614
    %v616 = vsel %vm401, %v604, -inf
    %617 = vmax.xlane.f32.xlu0 %v616
    %v618 = vpop.xlane.xlu0 %617
    %v619 = vsel %vm401, %v605, -inf
    %620 = vmax.xlane.f32.xlu0 %v619
    %v621 = vpop.xlane.xlu0 %620
    %v622 = vsel %vm401, %v606, -inf
    %623 = vmax.xlane.f32.xlu0 %v622
    %v624 = vpop.xlane.xlu0 %623
    %v625 = vsel %vm401, %v607, -inf
    %626 = vmax.xlane.f32.xlu0 %v625
    %v627 = vpop.xlane.xlu0 %626
    %v628 = vsel %vm401, %v608, -inf
    %629 = vmax.xlane.f32.xlu0 %v628
    %v630 = vpop.xlane.xlu0 %629
    %v631 = vsel %vm401, %v609, -inf
    %632 = vmax.xlane.f32.xlu0 %v631
    %v633 = vpop.xlane.xlu0 %632
    %vm634 = vcmp.eq.f32.partialorder %v602, %v612
    %vm635 = vcmp.eq.f32.partialorder %v603, %v615
    %vm636 = vcmp.eq.f32.partialorder %v604, %v618
    %vm637 = vcmp.eq.f32.partialorder %v605, %v621
    %vm638 = vcmp.eq.f32.partialorder %v606, %v624
    %vm639 = vcmp.eq.f32.partialorder %v607, %v627
    %vm640 = vcmp.eq.f32.partialorder %v608, %v630
    %vm641 = vcmp.eq.f32.partialorder %v609, %v633
    %v642 = vsel %vm634, %v375, 64
    %v643 = vsel %vm635, %v375, 64
    %v644 = vsel %vm636, %v375, 64
    %v645 = vsel %vm637, %v375, 64
    %v646 = vsel %vm638, %v375, 64
    %v647 = vsel %vm639, %v375, 64
    %v648 = vsel %vm640, %v375, 64
    %v649 = vsel %vm641, %v375, 64
    %v650 = vsel %vm401, %v642, 2147483647
    %v651 = vand.u32 %v650, 65535
    %v652 = vshra.s32 %v650, 16
    %v653 = vcvt.s32.f32 %v651
    %v654 = vcvt.s32.f32 %v652
    %655 = vmin.xlane.f32.xlu0 %v654
    %v656 = vpop.xlane.xlu0 %655
    %vm657 = vcmp.eq.f32.partialorder %v654, %v656
    %v658 = vsel %vm657, %v653, inf
    %659 = vmin.xlane.f32.xlu0 %v658
    %v660 = vpop.xlane.xlu0 %659
    %v661 = vcvt.f32.s32 %v660
    %v662 = vcvt.f32.s32 %v656
    %v663 = vshll.u32 %v662, 16
    %v664 = vadd.s32 %v663, %v661
    %v665 = vsel %vm401, %v643, 2147483647
    %v666 = vand.u32 %v665, 65535
    %v667 = vshra.s32 %v665, 16
    %v668 = vcvt.s32.f32 %v666
    %v669 = vcvt.s32.f32 %v667
    %670 = vmin.xlane.f32.xlu0 %v669
    %v671 = vpop.xlane.xlu0 %670
    %vm672 = vcmp.eq.f32.partialorder %v669, %v671
    %v673 = vsel %vm672, %v668, inf
    %674 = vmin.xlane.f32.xlu0 %v673
    %v675 = vpop.xlane.xlu0 %674
    %v676 = vcvt.f32.s32 %v675
    %v677 = vcvt.f32.s32 %v671
    %v678 = vshll.u32 %v677, 16
    %v679 = vadd.s32 %v678, %v676
    %v680 = vsel %vm401, %v644, 2147483647
    %v681 = vand.u32 %v680, 65535
    %v682 = vshra.s32 %v680, 16
    %v683 = vcvt.s32.f32 %v681
    %v684 = vcvt.s32.f32 %v682
    %685 = vmin.xlane.f32.xlu0 %v684
    %v686 = vpop.xlane.xlu0 %685
    %vm687 = vcmp.eq.f32.partialorder %v684, %v686
    %v688 = vsel %vm687, %v683, inf
    %689 = vmin.xlane.f32.xlu0 %v688
    %v690 = vpop.xlane.xlu0 %689
    %v691 = vcvt.f32.s32 %v690
    %v692 = vcvt.f32.s32 %v686
    %v693 = vshll.u32 %v692, 16
    %v694 = vadd.s32 %v693, %v691
    %v695 = vsel %vm401, %v645, 2147483647
    %v696 = vand.u32 %v695, 65535
    %v697 = vshra.s32 %v695, 16
    %v698 = vcvt.s32.f32 %v696
    %v699 = vcvt.s32.f32 %v697
    %700 = vmin.xlane.f32.xlu0 %v699
    %v701 = vpop.xlane.xlu0 %700
    %vm702 = vcmp.eq.f32.partialorder %v699, %v701
    %v703 = vsel %vm702, %v698, inf
    %704 = vmin.xlane.f32.xlu0 %v703
    %v705 = vpop.xlane.xlu0 %704
    %v706 = vcvt.f32.s32 %v705
    %v707 = vcvt.f32.s32 %v701
    %v708 = vshll.u32 %v707, 16
    %v709 = vadd.s32 %v708, %v706
    %v710 = vsel %vm401, %v646, 2147483647
    %v711 = vand.u32 %v710, 65535
    %v712 = vshra.s32 %v710, 16
    %v713 = vcvt.s32.f32 %v711
    %v714 = vcvt.s32.f32 %v712
    %715 = vmin.xlane.f32.xlu0 %v714
    %v716 = vpop.xlane.xlu0 %715
    %vm717 = vcmp.eq.f32.partialorder %v714, %v716
    %v718 = vsel %vm717, %v713, inf
    %719 = vmin.xlane.f32.xlu0 %v718
    %v720 = vpop.xlane.xlu0 %719
    %v721 = vcvt.f32.s32 %v720
    %v722 = vcvt.f32.s32 %v716
    %v723 = vshll.u32 %v722, 16
    %v724 = vadd.s32 %v723, %v721
    %v725 = vsel %vm401, %v647, 2147483647
    %v726 = vand.u32 %v725, 65535
    %v727 = vshra.s32 %v725, 16
    %v728 = vcvt.s32.f32 %v726
    %v729 = vcvt.s32.f32 %v727
    %730 = vmin.xlane.f32.xlu0 %v729
    %v731 = vpop.xlane.xlu0 %730
    %vm732 = vcmp.eq.f32.partialorder %v729, %v731
    %v733 = vsel %vm732, %v728, inf
    %734 = vmin.xlane.f32.xlu0 %v733
    %v735 = vpop.xlane.xlu0 %734
    %v736 = vcvt.f32.s32 %v735
    %v737 = vcvt.f32.s32 %v731
    %v738 = vshll.u32 %v737, 16
    %v739 = vadd.s32 %v738, %v736
    %v740 = vsel %vm401, %v648, 2147483647
    %v741 = vand.u32 %v740, 65535
    %v742 = vshra.s32 %v740, 16
    %v743 = vcvt.s32.f32 %v741
    %v744 = vcvt.s32.f32 %v742
    %745 = vmin.xlane.f32.xlu0 %v744
    %v746 = vpop.xlane.xlu0 %745
    %vm747 = vcmp.eq.f32.partialorder %v744, %v746
    %v748 = vsel %vm747, %v743, inf
    %749 = vmin.xlane.f32.xlu0 %v748
    %v750 = vpop.xlane.xlu0 %749
    %v751 = vcvt.f32.s32 %v750
    %v752 = vcvt.f32.s32 %v746
    %v753 = vshll.u32 %v752, 16
    %v754 = vadd.s32 %v753, %v751
    %v755 = vsel %vm401, %v649, 2147483647
    %v756 = vand.u32 %v755, 65535
    %v757 = vshra.s32 %v755, 16
    %v758 = vcvt.s32.f32 %v756
    %v759 = vcvt.s32.f32 %v757
    %760 = vmin.xlane.f32.xlu0 %v759
    %v761 = vpop.xlane.xlu0 %760
    %vm762 = vcmp.eq.f32.partialorder %v759, %v761
    %v763 = vsel %vm762, %v758, inf
    %764 = vmin.xlane.f32.xlu0 %v763
    %v765 = vpop.xlane.xlu0 %764
    %v766 = vcvt.f32.s32 %v765
    %v767 = vcvt.f32.s32 %v761
    %v768 = vshll.u32 %v767, 16
    %v769 = vadd.s32 %v768, %v766
    %vm770 = vcmp.eq.s32.totalorder %v375, %v664
    %vm771 = vcmp.eq.s32.totalorder %v375, %v679
    %vm772 = vcmp.eq.s32.totalorder %v375, %v694
    %vm773 = vcmp.eq.s32.totalorder %v375, %v709
    %vm774 = vcmp.eq.s32.totalorder %v375, %v724
    %vm775 = vcmp.eq.s32.totalorder %v375, %v739
    %vm776 = vcmp.eq.s32.totalorder %v375, %v754
    %vm777 = vcmp.eq.s32.totalorder %v375, %v769
    %v778 = vsel %vm770, 1, 0
    %v779 = vsel %vm771, 1, 0
    %v780 = vsel %vm772, 1, 0
    %v781 = vsel %vm773, 1, 0
    %v782 = vsel %vm774, 1, 0
    %v783 = vsel %vm775, 1, 0
    %v784 = vsel %vm776, 1, 0
    %v785 = vsel %vm777, 1, 0
    %v786 = vcvt.s32.f32 %v778
    %v787 = vcvt.s32.f32 %v779
    %v788 = vcvt.s32.f32 %v780
    %v789 = vcvt.s32.f32 %v781
    %v790 = vcvt.s32.f32 %v782
    %v791 = vcvt.s32.f32 %v783
    %v792 = vcvt.s32.f32 %v784
    %v793 = vcvt.s32.f32 %v785
    %v794 = vadd.f32 %v586, %v786
    %v795 = vadd.f32 %v587, %v787
    %v796 = vadd.f32 %v588, %v788
    %v797 = vadd.f32 %v589, %v789
    %v798 = vadd.f32 %v590, %v790
    %v799 = vadd.f32 %v591, %v791
    %v800 = vadd.f32 %v592, %v792
    %v801 = vadd.f32 %v593, %v793
    %vm802 = vcmp.gt.f32.partialorder %v786, 0.0
    %vm803 = vcmp.gt.f32.partialorder %v787, 0.0
    %vm804 = vcmp.gt.f32.partialorder %v788, 0.0
    %vm805 = vcmp.gt.f32.partialorder %v789, 0.0
    %vm806 = vcmp.gt.f32.partialorder %v790, 0.0
    %vm807 = vcmp.gt.f32.partialorder %v791, 0.0
    %vm808 = vcmp.gt.f32.partialorder %v792, 0.0
    %vm809 = vcmp.gt.f32.partialorder %v793, 0.0
    %v810 = vsel %vm802, -1.0, %v602
    %v811 = vsel %vm803, -1.0, %v603
    %v812 = vsel %vm804, -1.0, %v604
    %v813 = vsel %vm805, -1.0, %v605
    %v814 = vsel %vm806, -1.0, %v606
    %v815 = vsel %vm807, -1.0, %v607
    %v816 = vsel %vm808, -1.0, %v608
    %v817 = vsel %vm809, -1.0, %v609
    %v818 = vsel %vm401, %v810, -inf
    %819 = vmax.xlane.f32.xlu0 %v818
    %v820 = vpop.xlane.xlu0 %819
    %v821 = vsel %vm401, %v811, -inf
    %822 = vmax.xlane.f32.xlu0 %v821
    %v823 = vpop.xlane.xlu0 %822
    %v824 = vsel %vm401, %v812, -inf
    %825 = vmax.xlane.f32.xlu0 %v824
    %v826 = vpop.xlane.xlu0 %825
    %v827 = vsel %vm401, %v813, -inf
    %828 = vmax.xlane.f32.xlu0 %v827
    %v829 = vpop.xlane.xlu0 %828
    %v830 = vsel %vm401, %v814, -inf
    %831 = vmax.xlane.f32.xlu0 %v830
    %v832 = vpop.xlane.xlu0 %831
    %v833 = vsel %vm401, %v815, -inf
    %834 = vmax.xlane.f32.xlu0 %v833
    %v835 = vpop.xlane.xlu0 %834
    %v836 = vsel %vm401, %v816, -inf
    %837 = vmax.xlane.f32.xlu0 %v836
    %v838 = vpop.xlane.xlu0 %837
    %v839 = vsel %vm401, %v817, -inf
    %840 = vmax.xlane.f32.xlu0 %v839
    %v841 = vpop.xlane.xlu0 %840
    %vm842 = vcmp.eq.f32.partialorder %v810, %v820
    %vm843 = vcmp.eq.f32.partialorder %v811, %v823
    %vm844 = vcmp.eq.f32.partialorder %v812, %v826
    %vm845 = vcmp.eq.f32.partialorder %v813, %v829
    %vm846 = vcmp.eq.f32.partialorder %v814, %v832
    %vm847 = vcmp.eq.f32.partialorder %v815, %v835
    %vm848 = vcmp.eq.f32.partialorder %v816, %v838
    %vm849 = vcmp.eq.f32.partialorder %v817, %v841
    %v850 = vsel %vm842, %v375, 64
    %v851 = vsel %vm843, %v375, 64
    %v852 = vsel %vm844, %v375, 64
    %v853 = vsel %vm845, %v375, 64
    %v854 = vsel %vm846, %v375, 64
    %v855 = vsel %vm847, %v375, 64
    %v856 = vsel %vm848, %v375, 64
    %v857 = vsel %vm849, %v375, 64
    %v858 = vsel %vm401, %v850, 2147483647
    %v859 = vand.u32 %v858, 65535
    %v860 = vshra.s32 %v858, 16
    %v861 = vcvt.s32.f32 %v859
    %v862 = vcvt.s32.f32 %v860
    %863 = vmin.xlane.f32.xlu0 %v862
    %v864 = vpop.xlane.xlu0 %863
    %vm865 = vcmp.eq.f32.partialorder %v862, %v864
    %v866 = vsel %vm865, %v861, inf
    %867 = vmin.xlane.f32.xlu0 %v866
    %v868 = vpop.xlane.xlu0 %867
    %v869 = vcvt.f32.s32 %v868
    %v870 = vcvt.f32.s32 %v864
    %v871 = vshll.u32 %v870, 16
    %v872 = vadd.s32 %v871, %v869
    %v873 = vsel %vm401, %v851, 2147483647
    %v874 = vand.u32 %v873, 65535
    %v875 = vshra.s32 %v873, 16
    %v876 = vcvt.s32.f32 %v874
    %v877 = vcvt.s32.f32 %v875
    %878 = vmin.xlane.f32.xlu0 %v877
    %v879 = vpop.xlane.xlu0 %878
    %vm880 = vcmp.eq.f32.partialorder %v877, %v879
    %v881 = vsel %vm880, %v876, inf
    %882 = vmin.xlane.f32.xlu0 %v881
    %v883 = vpop.xlane.xlu0 %882
    %v884 = vcvt.f32.s32 %v883
    %v885 = vcvt.f32.s32 %v879
    %v886 = vshll.u32 %v885, 16
    %v887 = vadd.s32 %v886, %v884
    %v888 = vsel %vm401, %v852, 2147483647
    %v889 = vand.u32 %v888, 65535
    %v890 = vshra.s32 %v888, 16
    %v891 = vcvt.s32.f32 %v889
    %v892 = vcvt.s32.f32 %v890
    %893 = vmin.xlane.f32.xlu0 %v892
    %v894 = vpop.xlane.xlu0 %893
    %vm895 = vcmp.eq.f32.partialorder %v892, %v894
    %v896 = vsel %vm895, %v891, inf
    %897 = vmin.xlane.f32.xlu0 %v896
    %v898 = vpop.xlane.xlu0 %897
    %v899 = vcvt.f32.s32 %v898
    %v900 = vcvt.f32.s32 %v894
    %v901 = vshll.u32 %v900, 16
    %v902 = vadd.s32 %v901, %v899
    %v903 = vsel %vm401, %v853, 2147483647
    %v904 = vand.u32 %v903, 65535
    %v905 = vshra.s32 %v903, 16
    %v906 = vcvt.s32.f32 %v904
    %v907 = vcvt.s32.f32 %v905
    %908 = vmin.xlane.f32.xlu0 %v907
    %v909 = vpop.xlane.xlu0 %908
    %vm910 = vcmp.eq.f32.partialorder %v907, %v909
    %v911 = vsel %vm910, %v906, inf
    %912 = vmin.xlane.f32.xlu0 %v911
    %v913 = vpop.xlane.xlu0 %912
    %v914 = vcvt.f32.s32 %v913
    %v915 = vcvt.f32.s32 %v909
    %v916 = vshll.u32 %v915, 16
    %v917 = vadd.s32 %v916, %v914
    %v918 = vsel %vm401, %v854, 2147483647
    %v919 = vand.u32 %v918, 65535
    %v920 = vshra.s32 %v918, 16
    %v921 = vcvt.s32.f32 %v919
    %v922 = vcvt.s32.f32 %v920
    %923 = vmin.xlane.f32.xlu0 %v922
    %v924 = vpop.xlane.xlu0 %923
    %vm925 = vcmp.eq.f32.partialorder %v922, %v924
    %v926 = vsel %vm925, %v921, inf
    %927 = vmin.xlane.f32.xlu0 %v926
    %v928 = vpop.xlane.xlu0 %927
    %v929 = vcvt.f32.s32 %v928
    %v930 = vcvt.f32.s32 %v924
    %v931 = vshll.u32 %v930, 16
    %v932 = vadd.s32 %v931, %v929
    %v933 = vsel %vm401, %v855, 2147483647
    %v934 = vand.u32 %v933, 65535
    %v935 = vshra.s32 %v933, 16
    %v936 = vcvt.s32.f32 %v934
    %v937 = vcvt.s32.f32 %v935
    %938 = vmin.xlane.f32.xlu0 %v937
    %v939 = vpop.xlane.xlu0 %938
    %vm940 = vcmp.eq.f32.partialorder %v937, %v939
    %v941 = vsel %vm940, %v936, inf
    %942 = vmin.xlane.f32.xlu0 %v941
    %v943 = vpop.xlane.xlu0 %942
    %v944 = vcvt.f32.s32 %v943
    %v945 = vcvt.f32.s32 %v939
    %v946 = vshll.u32 %v945, 16
    %v947 = vadd.s32 %v946, %v944
    %v948 = vsel %vm401, %v856, 2147483647
    %v949 = vand.u32 %v948, 65535
    %v950 = vshra.s32 %v948, 16
    %v951 = vcvt.s32.f32 %v949
    %v952 = vcvt.s32.f32 %v950
    %953 = vmin.xlane.f32.xlu0 %v952
    %v954 = vpop.xlane.xlu0 %953
    %vm955 = vcmp.eq.f32.partialorder %v952, %v954
    %v956 = vsel %vm955, %v951, inf
    %957 = vmin.xlane.f32.xlu0 %v956
    %v958 = vpop.xlane.xlu0 %957
    %v959 = vcvt.f32.s32 %v958
    %v960 = vcvt.f32.s32 %v954
    %v961 = vshll.u32 %v960, 16
    %v962 = vadd.s32 %v961, %v959
    %v963 = vsel %vm401, %v857, 2147483647
    %v964 = vand.u32 %v963, 65535
    %v965 = vshra.s32 %v963, 16
    %v966 = vcvt.s32.f32 %v964
    %v967 = vcvt.s32.f32 %v965
    %968 = vmin.xlane.f32.xlu0 %v967
    %v969 = vpop.xlane.xlu0 %968
    %vm970 = vcmp.eq.f32.partialorder %v967, %v969
    %v971 = vsel %vm970, %v966, inf
    %972 = vmin.xlane.f32.xlu0 %v971
    %v973 = vpop.xlane.xlu0 %972
    %v974 = vcvt.f32.s32 %v973
    %v975 = vcvt.f32.s32 %v969
    %v976 = vshll.u32 %v975, 16
    %v977 = vadd.s32 %v976, %v974
    %vm978 = vcmp.eq.s32.totalorder %v375, %v872
    %vm979 = vcmp.eq.s32.totalorder %v375, %v887
    %vm980 = vcmp.eq.s32.totalorder %v375, %v902
    %vm981 = vcmp.eq.s32.totalorder %v375, %v917
    %vm982 = vcmp.eq.s32.totalorder %v375, %v932
    %vm983 = vcmp.eq.s32.totalorder %v375, %v947
    %vm984 = vcmp.eq.s32.totalorder %v375, %v962
    %vm985 = vcmp.eq.s32.totalorder %v375, %v977
    %v986 = vsel %vm978, 1, 0
    %v987 = vsel %vm979, 1, 0
    %v988 = vsel %vm980, 1, 0
    %v989 = vsel %vm981, 1, 0
    %v990 = vsel %vm982, 1, 0
    %v991 = vsel %vm983, 1, 0
    %v992 = vsel %vm984, 1, 0
    %v993 = vsel %vm985, 1, 0
    %v994 = vcvt.s32.f32 %v986
    %v995 = vcvt.s32.f32 %v987
    %v996 = vcvt.s32.f32 %v988
    %v997 = vcvt.s32.f32 %v989
    %v998 = vcvt.s32.f32 %v990
    %v999 = vcvt.s32.f32 %v991
    %v1000 = vcvt.s32.f32 %v992
    %v1001 = vcvt.s32.f32 %v993
    %v1002 = vadd.f32 %v794, %v994
    %v1003 = vadd.f32 %v795, %v995
    %v1004 = vadd.f32 %v796, %v996
    %v1005 = vadd.f32 %v797, %v997
    %v1006 = vadd.f32 %v798, %v998
    %v1007 = vadd.f32 %v799, %v999
    %v1008 = vadd.f32 %v800, %v1000
    %v1009 = vadd.f32 %v801, %v1001
    %v1010 = vmul.f32 %v393, %v1002
    %v1011 = vmul.f32 %v394, %v1003
    %v1012 = vmul.f32 %v395, %v1004
    %v1013 = vmul.f32 %v396, %v1005
    %v1014 = vmul.f32 %v397, %v1006
    %v1015 = vmul.f32 %v398, %v1007
    %v1016 = vmul.f32 %v399, %v1008
    %v1017 = vmul.f32 %v400, %v1009
    %v1018 = vld [vmem:[#allocation5] sm:$0xff]
    %v1020 = vsel %vm401, %v1010, 0
    %v1023 = vsel %vm401, %v1011, 0
    %v1026 = vsel %vm401, %v1012, 0
    %v1029 = vsel %vm401, %v1013, 0
    %v1032 = vsel %vm401, %v1014, 0
    %v1035 = vsel %vm401, %v1015, 0
    %v1038 = vsel %vm401, %v1016, 0
    %v1041 = vsel %vm401, %v1017, 0
    %1043 = vmatprep.subr.mxu0 0.0
    %1044 = vmatpush1.msra.mxu0 0.0
    %1045 = vmatprep.subr.mxu0 0.0
    %1046 = vmatpush1.msra.mxu0 0.0
    %1047 = vmatprep.subr.mxu0 0.0
    %1048 = vmatpush1.msra.mxu0 0.0
    %1049 = vmatprep.subr.mxu0 0.0
    %1050 = vmatpush1.msra.mxu0 0.0
    %1051 = vmatprep.subr.mxu0 0.0
    %1052 = vmatpush1.msra.mxu0 0.0
    %1053 = vmatprep.subr.mxu0 0.0
    %1054 = vmatpush1.msra.mxu0 0.0
    %1055 = vmatprep.subr.mxu0 0.0
    %1056 = vmatpush1.msra.mxu0 0.0
    %1057 = vmatprep.subr.mxu0 0.0
    %1058 = vmatpush1.msra.mxu0 0.0
    %1059 = vmatprep.subr.mxu0 0.0
    %1060 = vmatpush1.msra.mxu0 %v117
    %1061 = vmatprep.subr.mxu0 0.0
    %1062 = vmatpush1.msra.mxu0 %v114
    %1063 = vmatprep.subr.mxu0 0.0
    %1064 = vmatpush1.msra.mxu0 %v111
    %1065 = vmatprep.subr.mxu0 0.0
    %1066 = vmatpush1.msra.mxu0 %v108
    %1067 = vmatprep.subr.mxu0 0.0
    %1068 = vmatpush1.msra.mxu0 %v105
    %1069 = vmatprep.subr.mxu0 0.0
    %1070 = vmatpush1.msra.mxu0 %v101
    %1071 = vmatprep.subr.mxu0 0.0
    %1072 = vmatpush1.msra.mxu0 %v98
    %1073 = vmatprep.subr.mxu0 0.0
    %1074 = vmatpush1.msra.mxu0 %v97
    %1075 = vmatprep.subr.mxu0 0.0
    %1076 = vmatpush2.msra.mxu0 0.0
    %1077 = vmatprep.subr.mxu0 0.0
    %1078 = vmatpush2.msra.mxu0 0.0
    %1079 = vmatprep.subr.mxu0 0.0
    %1080 = vmatpush2.msra.mxu0 0.0
    %1081 = vmatprep.subr.mxu0 0.0
    %1082 = vmatpush2.msra.mxu0 0.0
    %1083 = vmatprep.subr.mxu0 0.0
    %1084 = vmatpush2.msra.mxu0 0.0
    %1085 = vmatprep.subr.mxu0 0.0
    %1086 = vmatpush2.msra.mxu0 0.0
    %1087 = vmatprep.subr.mxu0 0.0
    %1088 = vmatpush2.msra.mxu0 0.0
    %1089 = vmatprep.subr.mxu0 0.0
    %1090 = vmatpush2.msra.mxu0 0.0
    %1091 = vmatprep.subr.mxu0 0.0
    %1092 = vmatpush2.msra.mxu0 0.0
    %1093 = vmatprep.subr.mxu0 0.0
    %1094 = vmatpush2.msra.mxu0 0.0
    %1095 = vmatprep.subr.mxu0 0.0
    %1096 = vmatpush2.msra.mxu0 0.0
    %1097 = vmatprep.subr.mxu0 0.0
    %1098 = vmatpush2.msra.mxu0 0.0
    %1099 = vmatprep.subr.mxu0 0.0
    %1100 = vmatpush2.msra.mxu0 0.0
    %1101 = vmatprep.subr.mxu0 0.0
    %1102 = vmatpush2.msra.mxu0 0.0
    %1103 = vmatprep.subr.mxu0 0.0
    %1104 = vmatpush2.msra.mxu0 0.0
    %1105 = vmatprep.subr.mxu0 0.0
    %1106 = vmatpush2.msra.mxu0 0.0
    %1107 = vmatprep.mubr.f32.mxu0 0.0
    %1108 = vmatmul.mubr.f32.gmra.mxu0 %v1020
    %v1109 = vpop.f32.mrf.mxu0
    %v1110 = vadd.f32 0.0, %v1109
    %v1111 = vpop.f32.mrf.mxu0
    %1112 = vmatprep.mubr.f32.mxu0 0.0
    %1113 = vmatmul.mubr.f32.gmra.mxu0 %v1023
    %v1114 = vpop.f32.mrf.mxu0
    %v1115 = vadd.f32 0.0, %v1114
    %v1116 = vpop.f32.mrf.mxu0
    %1117 = vmatprep.mubr.f32.mxu0 0.0
    %1118 = vmatmul.mubr.f32.gmra.mxu0 %v1026
    %v1119 = vpop.f32.mrf.mxu0
    %v1120 = vadd.f32 0.0, %v1119
    %v1121 = vpop.f32.mrf.mxu0
    %1122 = vmatprep.mubr.f32.mxu0 0.0
    %1123 = vmatmul.mubr.f32.gmra.mxu0 %v1029
    %v1124 = vpop.f32.mrf.mxu0
    %v1125 = vadd.f32 0.0, %v1124
    %v1126 = vpop.f32.mrf.mxu0
    %1127 = vmatprep.mubr.f32.mxu0 0.0
    %1128 = vmatmul.mubr.f32.gmra.mxu0 %v1032
    %v1129 = vpop.f32.mrf.mxu0
    %v1130 = vadd.f32 0.0, %v1129
    %v1131 = vpop.f32.mrf.mxu0
    %1132 = vmatprep.mubr.f32.mxu0 0.0
    %1133 = vmatmul.mubr.f32.gmra.mxu0 %v1035
    %v1134 = vpop.f32.mrf.mxu0
    %v1135 = vadd.f32 0.0, %v1134
    %v1136 = vpop.f32.mrf.mxu0
    %1137 = vmatprep.mubr.f32.mxu0 0.0
    %1138 = vmatmul.mubr.f32.gmra.mxu0 %v1038
    %v1139 = vpop.f32.mrf.mxu0
    %v1140 = vadd.f32 0.0, %v1139
    %v1141 = vpop.f32.mrf.mxu0
    %1142 = vmatprep.mubr.f32.mxu0 0.0
    %1143 = vmatmul.mubr.f32.gmra.mxu0 %v1041
    %v1144 = vpop.f32.mrf.mxu0
    %v1145 = vadd.f32 0.0, %v1144
    %v1146 = vpop.f32.mrf.mxu0
    %1147 = vdwg.mxu0
    %s1148 = scalar_lea.vmem [#allocation5], 8
    %v1149 = vld [vmem:[%s1148] sm:$0xff]
    %v1151 = vsel %vm127, %v1110, 0
    %v1154 = vsel %vm127, %v1115, 0
    %v1157 = vsel %vm127, %v1120, 0
    %v1160 = vsel %vm127, %v1125, 0
    %v1163 = vsel %vm127, %v1130, 0
    %v1166 = vsel %vm127, %v1135, 0
    %v1169 = vsel %vm127, %v1140, 0
    %v1172 = vsel %vm127, %v1145, 0
    %1174 = vmatprep.subr.mxu0 0.0
    %1175 = vmatpush1.msra.mxu0 0.0
    %1176 = vmatprep.subr.mxu0 0.0
    %1177 = vmatpush1.msra.mxu0 0.0
    %1178 = vmatprep.subr.mxu0 0.0
    %1179 = vmatpush1.msra.mxu0 0.0
    %1180 = vmatprep.subr.mxu0 0.0
    %1181 = vmatpush1.msra.mxu0 0.0
    %1182 = vmatprep.subr.mxu0 0.0
    %1183 = vmatpush1.msra.mxu0 0.0
    %1184 = vmatprep.subr.mxu0 0.0
    %1185 = vmatpush1.msra.mxu0 0.0
    %1186 = vmatprep.subr.mxu0 0.0
    %1187 = vmatpush1.msra.mxu0 0.0
    %1188 = vmatprep.subr.mxu0 0.0
    %1189 = vmatpush1.msra.mxu0 0.0
    %1190 = vmatprep.subr.mxu0 0.0
    %1191 = vmatpush1.msra.mxu0 0.0
    %1192 = vmatprep.subr.mxu0 0.0
    %1193 = vmatpush1.msra.mxu0 0.0
    %1194 = vmatprep.subr.mxu0 0.0
    %1195 = vmatpush1.msra.mxu0 0.0
    %1196 = vmatprep.subr.mxu0 0.0
    %1197 = vmatpush1.msra.mxu0 0.0
    %1198 = vmatprep.subr.mxu0 0.0
    %1199 = vmatpush1.msra.mxu0 0.0
    %1200 = vmatprep.subr.mxu0 0.0
    %1201 = vmatpush1.msra.mxu0 0.0
    %1202 = vmatprep.subr.mxu0 0.0
    %1203 = vmatpush1.msra.mxu0 0.0
    %1204 = vmatprep.subr.mxu0 0.0
    %1205 = vmatpush1.msra.mxu0 %v1149
    %1206 = vmatprep.subr.mxu0 0.0
    %1207 = vmatpush2.msra.mxu0 0.0
    %1208 = vmatprep.subr.mxu0 0.0
    %1209 = vmatpush2.msra.mxu0 0.0
    %1210 = vmatprep.subr.mxu0 0.0
    %1211 = vmatpush2.msra.mxu0 0.0
    %1212 = vmatprep.subr.mxu0 0.0
    %1213 = vmatpush2.msra.mxu0 0.0
    %1214 = vmatprep.subr.mxu0 0.0
    %1215 = vmatpush2.msra.mxu0 0.0
    %1216 = vmatprep.subr.mxu0 0.0
    %1217 = vmatpush2.msra.mxu0 0.0
    %1218 = vmatprep.subr.mxu0 0.0
    %1219 = vmatpush2.msra.mxu0 0.0
    %1220 = vmatprep.subr.mxu0 0.0
    %1221 = vmatpush2.msra.mxu0 0.0
    %1222 = vmatprep.subr.mxu0 0.0
    %1223 = vmatpush2.msra.mxu0 0.0
    %1224 = vmatprep.subr.mxu0 0.0
    %1225 = vmatpush2.msra.mxu0 0.0
    %1226 = vmatprep.subr.mxu0 0.0
    %1227 = vmatpush2.msra.mxu0 0.0
    %1228 = vmatprep.subr.mxu0 0.0
    %1229 = vmatpush2.msra.mxu0 0.0
    %1230 = vmatprep.subr.mxu0 0.0
    %1231 = vmatpush2.msra.mxu0 0.0
    %1232 = vmatprep.subr.mxu0 0.0
    %1233 = vmatpush2.msra.mxu0 0.0
    %1234 = vmatprep.subr.mxu0 0.0
    %1235 = vmatpush2.msra.mxu0 0.0
    %1236 = vmatprep.subr.mxu0 0.0
    %1237 = vmatpush2.msra.mxu0 0.0
    %1238 = vmatprep.mubr.f32.mxu0 0.0
    %1239 = vmatmul.mubr.f32.gmra.mxu0 %v1151
    %v1240 = vpop.f32.mrf.mxu0
    %v1241 = vadd.f32 0.0, %v1240
    %v1242 = vpop.f32.mrf.mxu0
    %1243 = vmatprep.mubr.f32.mxu0 0.0
    %1244 = vmatmul.mubr.f32.gmra.mxu0 %v1154
    %v1245 = vpop.f32.mrf.mxu0
    %v1246 = vadd.f32 0.0, %v1245
    %v1247 = vpop.f32.mrf.mxu0
    %1248 = vmatprep.mubr.f32.mxu0 0.0
    %1249 = vmatmul.mubr.f32.gmra.mxu0 %v1157
    %v1250 = vpop.f32.mrf.mxu0
    %v1251 = vadd.f32 0.0, %v1250
    %v1252 = vpop.f32.mrf.mxu0
    %1253 = vmatprep.mubr.f32.mxu0 0.0
    %1254 = vmatmul.mubr.f32.gmra.mxu0 %v1160
    %v1255 = vpop.f32.mrf.mxu0
    %v1256 = vadd.f32 0.0, %v1255
    %v1257 = vpop.f32.mrf.mxu0
    %1258 = vmatprep.mubr.f32.mxu0 0.0
    %1259 = vmatmul.mubr.f32.gmra.mxu0 %v1163
    %v1260 = vpop.f32.mrf.mxu0
    %v1261 = vadd.f32 0.0, %v1260
    %v1262 = vpop.f32.mrf.mxu0
    %1263 = vmatprep.mubr.f32.mxu0 0.0
    %1264 = vmatmul.mubr.f32.gmra.mxu0 %v1166
    %v1265 = vpop.f32.mrf.mxu0
    %v1266 = vadd.f32 0.0, %v1265
    %v1267 = vpop.f32.mrf.mxu0
    %1268 = vmatprep.mubr.f32.mxu0 0.0
    %1269 = vmatmul.mubr.f32.gmra.mxu0 %v1169
    %v1270 = vpop.f32.mrf.mxu0
    %v1271 = vadd.f32 0.0, %v1270
    %v1272 = vpop.f32.mrf.mxu0
    %1273 = vmatprep.mubr.f32.mxu0 0.0
    %1274 = vmatmul.mubr.f32.gmra.mxu0 %v1172
    %v1275 = vpop.f32.mrf.mxu0
    %v1276 = vadd.f32 0.0, %v1275
    %v1277 = vpop.f32.mrf.mxu0
    %1278 = vdwg.mxu0
    %1279 = vmatprep.subr.mxu0 0.0
    %1280 = vmatpush1.msra.mxu0 0.0
    %1281 = vmatprep.subr.mxu0 0.0
    %1282 = vmatpush1.msra.mxu0 0.0
    %1283 = vmatprep.subr.mxu0 0.0
    %1284 = vmatpush1.msra.mxu0 0.0
    %1285 = vmatprep.subr.mxu0 0.0
    %1286 = vmatpush1.msra.mxu0 0.0
    %1287 = vmatprep.subr.mxu0 0.0
    %1288 = vmatpush1.msra.mxu0 0.0
    %1289 = vmatprep.subr.mxu0 0.0
    %1290 = vmatpush1.msra.mxu0 0.0
    %1291 = vmatprep.subr.mxu0 0.0
    %1292 = vmatpush1.msra.mxu0 0.0
    %1293 = vmatprep.subr.mxu0 0.0
    %1294 = vmatpush1.msra.mxu0 0.0
    %1295 = vmatprep.subr.mxu0 0.0
    %1296 = vmatpush1.msra.mxu0 0.0
    %1297 = vmatprep.subr.mxu0 0.0
    %1298 = vmatpush1.msra.mxu0 0.0
    %1299 = vmatprep.subr.mxu0 0.0
    %1300 = vmatpush1.msra.mxu0 0.0
    %1301 = vmatprep.subr.mxu0 0.0
    %1302 = vmatpush1.msra.mxu0 0.0
    %1303 = vmatprep.subr.mxu0 0.0
    %1304 = vmatpush1.msra.mxu0 0.0
    %1305 = vmatprep.subr.mxu0 0.0
    %1306 = vmatpush1.msra.mxu0 0.0
    %1307 = vmatprep.subr.mxu0 0.0
    %1308 = vmatpush1.msra.mxu0 0.0
    %1309 = vmatprep.subr.mxu0 0.0
    %1310 = vmatpush1.msra.mxu0 %v1018
    %1311 = vmatprep.subr.mxu0 0.0
    %1312 = vmatpush2.msra.mxu0 0.0
    %1313 = vmatprep.subr.mxu0 0.0
    %1314 = vmatpush2.msra.mxu0 0.0
    %1315 = vmatprep.subr.mxu0 0.0
    %1316 = vmatpush2.msra.mxu0 0.0
    %1317 = vmatprep.subr.mxu0 0.0
    %1318 = vmatpush2.msra.mxu0 0.0
    %1319 = vmatprep.subr.mxu0 0.0
    %1320 = vmatpush2.msra.mxu0 0.0
    %1321 = vmatprep.subr.mxu0 0.0
    %1322 = vmatpush2.msra.mxu0 0.0
    %1323 = vmatprep.subr.mxu0 0.0
    %1324 = vmatpush2.msra.mxu0 0.0
    %1325 = vmatprep.subr.mxu0 0.0
    %1326 = vmatpush2.msra.mxu0 0.0
    %1327 = vmatprep.subr.mxu0 0.0
    %1328 = vmatpush2.msra.mxu0 0.0
    %1329 = vmatprep.subr.mxu0 0.0
    %1330 = vmatpush2.msra.mxu0 0.0
    %1331 = vmatprep.subr.mxu0 0.0
    %1332 = vmatpush2.msra.mxu0 0.0
    %1333 = vmatprep.subr.mxu0 0.0
    %1334 = vmatpush2.msra.mxu0 0.0
    %1335 = vmatprep.subr.mxu0 0.0
    %1336 = vmatpush2.msra.mxu0 0.0
    %1337 = vmatprep.subr.mxu0 0.0
    %1338 = vmatpush2.msra.mxu0 0.0
    %1339 = vmatprep.subr.mxu0 0.0
    %1340 = vmatpush2.msra.mxu0 0.0
    %1341 = vmatprep.subr.mxu0 0.0
    %1342 = vmatpush2.msra.mxu0 0.0
    %1343 = vmatprep.mubr.f32.mxu0 0.0
    %1344 = vmatmul.mubr.f32.gmra.mxu0 %v152
    %v1345 = vpop.f32.mrf.mxu0
    %v1346 = vadd.f32 %v1241, %v1345
    %v1347 = vpop.f32.mrf.mxu0
    %1348 = vmatprep.mubr.f32.mxu0 0.0
    %1349 = vmatmul.mubr.f32.gmra.mxu0 %v154
    %v1350 = vpop.f32.mrf.mxu0
    %v1351 = vadd.f32 %v1246, %v1350
    %v1352 = vpop.f32.mrf.mxu0
    %1353 = vmatprep.mubr.f32.mxu0 0.0
    %1354 = vmatmul.mubr.f32.gmra.mxu0 %v156
    %v1355 = vpop.f32.mrf.mxu0
    %v1356 = vadd.f32 %v1251, %v1355
    %v1357 = vpop.f32.mrf.mxu0
    %1358 = vmatprep.mubr.f32.mxu0 0.0
    %1359 = vmatmul.mubr.f32.gmra.mxu0 %v158
    %v1360 = vpop.f32.mrf.mxu0
    %v1361 = vadd.f32 %v1256, %v1360
    %v1362 = vpop.f32.mrf.mxu0
    %1363 = vmatprep.mubr.f32.mxu0 0.0
    %1364 = vmatmul.mubr.f32.gmra.mxu0 %v160
    %v1365 = vpop.f32.mrf.mxu0
    %v1366 = vadd.f32 %v1261, %v1365
    %v1367 = vpop.f32.mrf.mxu0
    %1368 = vmatprep.mubr.f32.mxu0 0.0
    %1369 = vmatmul.mubr.f32.gmra.mxu0 %v162
    %v1370 = vpop.f32.mrf.mxu0
    %v1371 = vadd.f32 %v1266, %v1370
    %v1372 = vpop.f32.mrf.mxu0
    %1373 = vmatprep.mubr.f32.mxu0 0.0
    %1374 = vmatmul.mubr.f32.gmra.mxu0 %v164
    %v1375 = vpop.f32.mrf.mxu0
    %v1376 = vadd.f32 %v1271, %v1375
    %v1377 = vpop.f32.mrf.mxu0
    %1378 = vmatprep.mubr.f32.mxu0 0.0
    %1379 = vmatmul.mubr.f32.gmra.mxu0 %v166
    %v1380 = vpop.f32.mrf.mxu0
    %v1381 = vadd.f32 %v1276, %v1380
    %v1382 = vpop.f32.mrf.mxu0
    %1383 = vdwg.mxu0
    %1384 = vmatprep.subr.mxu0 0.0
    %1385 = vmatpush1.msra.mxu0 0.0
    %1386 = vmatprep.subr.mxu0 0.0
    %1387 = vmatpush1.msra.mxu0 0.0
    %1388 = vmatprep.subr.mxu0 0.0
    %1389 = vmatpush1.msra.mxu0 0.0
    %1390 = vmatprep.subr.mxu0 0.0
    %1391 = vmatpush1.msra.mxu0 0.0
    %1392 = vmatprep.subr.mxu0 0.0
    %1393 = vmatpush1.msra.mxu0 0.0
    %1394 = vmatprep.subr.mxu0 0.0
    %1395 = vmatpush1.msra.mxu0 0.0
    %1396 = vmatprep.subr.mxu0 0.0
    %1397 = vmatpush1.msra.mxu0 0.0
    %1398 = vmatprep.subr.mxu0 0.0
    %1399 = vmatpush1.msra.mxu0 0.0
    %1400 = vmatprep.subr.mxu0 0.0
    %1401 = vmatpush1.msra.mxu0 %v1145
    %1402 = vmatprep.subr.mxu0 0.0
    %1403 = vmatpush1.msra.mxu0 %v1140
    %1404 = vmatprep.subr.mxu0 0.0
    %1405 = vmatpush1.msra.mxu0 %v1135
    %1406 = vmatprep.subr.mxu0 0.0
    %1407 = vmatpush1.msra.mxu0 %v1130
    %1408 = vmatprep.subr.mxu0 0.0
    %1409 = vmatpush1.msra.mxu0 %v1125
    %1410 = vmatprep.subr.mxu0 0.0
    %1411 = vmatpush1.msra.mxu0 %v1120
    %1412 = vmatprep.subr.mxu0 0.0
    %1413 = vmatpush1.msra.mxu0 %v1115
    %1414 = vmatprep.subr.mxu0 0.0
    %1415 = vmatpush1.msra.mxu0 %v1110
    %1416 = vmatprep.subr.mxu0 0.0
    %1417 = vmatpush2.msra.mxu0 0.0
    %1418 = vmatprep.subr.mxu0 0.0
    %1419 = vmatpush2.msra.mxu0 0.0
    %1420 = vmatprep.subr.mxu0 0.0
    %1421 = vmatpush2.msra.mxu0 0.0
    %1422 = vmatprep.subr.mxu0 0.0
    %1423 = vmatpush2.msra.mxu0 0.0
    %1424 = vmatprep.subr.mxu0 0.0
    %1425 = vmatpush2.msra.mxu0 0.0
    %1426 = vmatprep.subr.mxu0 0.0
    %1427 = vmatpush2.msra.mxu0 0.0
    %1428 = vmatprep.subr.mxu0 0.0
    %1429 = vmatpush2.msra.mxu0 0.0
    %1430 = vmatprep.subr.mxu0 0.0
    %1431 = vmatpush2.msra.mxu0 0.0
    %1432 = vmatprep.subr.mxu0 0.0
    %1433 = vmatpush2.msra.mxu0 0.0
    %1434 = vmatprep.subr.mxu0 0.0
    %1435 = vmatpush2.msra.mxu0 0.0
    %1436 = vmatprep.subr.mxu0 0.0
    %1437 = vmatpush2.msra.mxu0 0.0
    %1438 = vmatprep.subr.mxu0 0.0
    %1439 = vmatpush2.msra.mxu0 0.0
    %1440 = vmatprep.subr.mxu0 0.0
    %1441 = vmatpush2.msra.mxu0 0.0
    %1442 = vmatprep.subr.mxu0 0.0
    %1443 = vmatpush2.msra.mxu0 0.0
    %1444 = vmatprep.subr.mxu0 0.0
    %1445 = vmatpush2.msra.mxu0 0.0
    %1446 = vmatprep.subr.mxu0 0.0
    %1447 = vmatpush2.msra.mxu0 0.0
    %1448 = vmatprep.mubr.f32.mxu0 0.0
    %1449 = vmatmul.mubr.f32.gmra.mxu0 %v1020
    %v1450 = vpop.f32.mrf.mxu0
    %v1451 = vadd.f32 0.0, %v1450
    %v1452 = vpop.f32.mrf.mxu0
    %1453 = vmatprep.mubr.f32.mxu0 0.0
    %1454 = vmatmul.mubr.f32.gmra.mxu0 %v1023
    %v1455 = vpop.f32.mrf.mxu0
    %v1456 = vadd.f32 0.0, %v1455
    %v1457 = vpop.f32.mrf.mxu0
    %1458 = vmatprep.mubr.f32.mxu0 0.0
    %1459 = vmatmul.mubr.f32.gmra.mxu0 %v1026
    %v1460 = vpop.f32.mrf.mxu0
    %v1461 = vadd.f32 0.0, %v1460
    %v1462 = vpop.f32.mrf.mxu0
    %1463 = vmatprep.mubr.f32.mxu0 0.0
    %1464 = vmatmul.mubr.f32.gmra.mxu0 %v1029
    %v1465 = vpop.f32.mrf.mxu0
    %v1466 = vadd.f32 0.0, %v1465
    %v1467 = vpop.f32.mrf.mxu0
    %1468 = vmatprep.mubr.f32.mxu0 0.0
    %1469 = vmatmul.mubr.f32.gmra.mxu0 %v1032
    %v1470 = vpop.f32.mrf.mxu0
    %v1471 = vadd.f32 0.0, %v1470
    %v1472 = vpop.f32.mrf.mxu0
    %1473 = vmatprep.mubr.f32.mxu0 0.0
    %1474 = vmatmul.mubr.f32.gmra.mxu0 %v1035
    %v1475 = vpop.f32.mrf.mxu0
    %v1476 = vadd.f32 0.0, %v1475
    %v1477 = vpop.f32.mrf.mxu0
    %1478 = vmatprep.mubr.f32.mxu0 0.0
    %1479 = vmatmul.mubr.f32.gmra.mxu0 %v1038
    %v1480 = vpop.f32.mrf.mxu0
    %v1481 = vadd.f32 0.0, %v1480
    %v1482 = vpop.f32.mrf.mxu0
    %1483 = vmatprep.mubr.f32.mxu0 0.0
    %1484 = vmatmul.mubr.f32.gmra.mxu0 %v1041
    %v1485 = vpop.f32.mrf.mxu0
    %v1486 = vadd.f32 0.0, %v1485
    %v1487 = vpop.f32.mrf.mxu0
    %1488 = vdwg.mxu0
    %v1489 = vmul.f32 %v1451, 2.0
    %v1490 = vmul.f32 %v1456, 2.0
    %v1491 = vmul.f32 %v1461, 2.0
    %v1492 = vmul.f32 %v1466, 2.0
    %v1493 = vmul.f32 %v1471, 2.0
    %v1494 = vmul.f32 %v1476, 2.0
    %v1495 = vmul.f32 %v1481, 2.0
    %v1496 = vmul.f32 %v1486, 2.0
    %v1497 = vsub.f32 %v1489, %v97
    %v1498 = vsub.f32 %v1490, %v98
    %v1499 = vsub.f32 %v1491, %v101
    %v1500 = vsub.f32 %v1492, %v105
    %v1501 = vsub.f32 %v1493, %v108
    %v1502 = vsub.f32 %v1494, %v111
    %v1503 = vsub.f32 %v1495, %v114
    %v1504 = vsub.f32 %v1496, %v117
    %s1505 = scalar_lea.vmem [#allocation5], 16
    %v1506 = vld [vmem:[%s1505] sm:$0xff]
    %v1508 = vsel %vm127, %v1497, 0
    %v1511 = vsel %vm127, %v1498, 0
    %v1514 = vsel %vm127, %v1499, 0
    %v1517 = vsel %vm127, %v1500, 0
    %v1520 = vsel %vm127, %v1501, 0
    %v1523 = vsel %vm127, %v1502, 0
    %v1526 = vsel %vm127, %v1503, 0
    %v1529 = vsel %vm127, %v1504, 0
    %1531 = vmatprep.subr.mxu0 0.0
    %1532 = vmatpush1.msra.mxu0 0.0
    %1533 = vmatprep.subr.mxu0 0.0
    %1534 = vmatpush1.msra.mxu0 0.0
    %1535 = vmatprep.subr.mxu0 0.0
    %1536 = vmatpush1.msra.mxu0 0.0
    %1537 = vmatprep.subr.mxu0 0.0
    %1538 = vmatpush1.msra.mxu0 0.0
    %1539 = vmatprep.subr.mxu0 0.0
    %1540 = vmatpush1.msra.mxu0 0.0
    %1541 = vmatprep.subr.mxu0 0.0
    %1542 = vmatpush1.msra.mxu0 0.0
    %1543 = vmatprep.subr.mxu0 0.0
    %1544 = vmatpush1.msra.mxu0 0.0
    %1545 = vmatprep.subr.mxu0 0.0
    %1546 = vmatpush1.msra.mxu0 0.0
    %1547 = vmatprep.subr.mxu0 0.0
    %1548 = vmatpush1.msra.mxu0 0.0
    %1549 = vmatprep.subr.mxu0 0.0
    %1550 = vmatpush1.msra.mxu0 0.0
    %1551 = vmatprep.subr.mxu0 0.0
    %1552 = vmatpush1.msra.mxu0 0.0
    %1553 = vmatprep.subr.mxu0 0.0
    %1554 = vmatpush1.msra.mxu0 0.0
    %1555 = vmatprep.subr.mxu0 0.0
    %1556 = vmatpush1.msra.mxu0 0.0
    %1557 = vmatprep.subr.mxu0 0.0
    %1558 = vmatpush1.msra.mxu0 0.0
    %1559 = vmatprep.subr.mxu0 0.0
    %1560 = vmatpush1.msra.mxu0 0.0
    %1561 = vmatprep.subr.mxu0 0.0
    %1562 = vmatpush1.msra.mxu0 %v1506
    %1563 = vmatprep.subr.mxu0 0.0
    %1564 = vmatpush2.msra.mxu0 0.0
    %1565 = vmatprep.subr.mxu0 0.0
    %1566 = vmatpush2.msra.mxu0 0.0
    %1567 = vmatprep.subr.mxu0 0.0
    %1568 = vmatpush2.msra.mxu0 0.0
    %1569 = vmatprep.subr.mxu0 0.0
    %1570 = vmatpush2.msra.mxu0 0.0
    %1571 = vmatprep.subr.mxu0 0.0
    %1572 = vmatpush2.msra.mxu0 0.0
    %1573 = vmatprep.subr.mxu0 0.0
    %1574 = vmatpush2.msra.mxu0 0.0
    %1575 = vmatprep.subr.mxu0 0.0
    %1576 = vmatpush2.msra.mxu0 0.0
    %1577 = vmatprep.subr.mxu0 0.0
    %1578 = vmatpush2.msra.mxu0 0.0
    %1579 = vmatprep.subr.mxu0 0.0
    %1580 = vmatpush2.msra.mxu0 0.0
    %1581 = vmatprep.subr.mxu0 0.0
    %1582 = vmatpush2.msra.mxu0 0.0
    %1583 = vmatprep.subr.mxu0 0.0
    %1584 = vmatpush2.msra.mxu0 0.0
    %1585 = vmatprep.subr.mxu0 0.0
    %1586 = vmatpush2.msra.mxu0 0.0
    %1587 = vmatprep.subr.mxu0 0.0
    %1588 = vmatpush2.msra.mxu0 0.0
    %1589 = vmatprep.subr.mxu0 0.0
    %1590 = vmatpush2.msra.mxu0 0.0
    %1591 = vmatprep.subr.mxu0 0.0
    %1592 = vmatpush2.msra.mxu0 0.0
    %1593 = vmatprep.subr.mxu0 0.0
    %1594 = vmatpush2.msra.mxu0 0.0
    %1595 = vmatprep.mubr.f32.mxu0 0.0
    %1596 = vmatmul.mubr.f32.gmra.mxu0 %v1508
    %v1597 = vpop.f32.mrf.mxu0
    %v1598 = vadd.f32 0.0, %v1597
    %v1599 = vpop.f32.mrf.mxu0
    %1600 = vmatprep.mubr.f32.mxu0 0.0
    %1601 = vmatmul.mubr.f32.gmra.mxu0 %v1511
    %v1602 = vpop.f32.mrf.mxu0
    %v1603 = vadd.f32 0.0, %v1602
    %v1604 = vpop.f32.mrf.mxu0
    %1605 = vmatprep.mubr.f32.mxu0 0.0
    %1606 = vmatmul.mubr.f32.gmra.mxu0 %v1514
    %v1607 = vpop.f32.mrf.mxu0
    %v1608 = vadd.f32 0.0, %v1607
    %v1609 = vpop.f32.mrf.mxu0
    %1610 = vmatprep.mubr.f32.mxu0 0.0
    %1611 = vmatmul.mubr.f32.gmra.mxu0 %v1517
    %v1612 = vpop.f32.mrf.mxu0
    %v1613 = vadd.f32 0.0, %v1612
    %v1614 = vpop.f32.mrf.mxu0
    %1615 = vmatprep.mubr.f32.mxu0 0.0
    %1616 = vmatmul.mubr.f32.gmra.mxu0 %v1520
    %v1617 = vpop.f32.mrf.mxu0
    %v1618 = vadd.f32 0.0, %v1617
    %v1619 = vpop.f32.mrf.mxu0
    %1620 = vmatprep.mubr.f32.mxu0 0.0
    %1621 = vmatmul.mubr.f32.gmra.mxu0 %v1523
    %v1622 = vpop.f32.mrf.mxu0
    %v1623 = vadd.f32 0.0, %v1622
    %v1624 = vpop.f32.mrf.mxu0
    %1625 = vmatprep.mubr.f32.mxu0 0.0
    %1626 = vmatmul.mubr.f32.gmra.mxu0 %v1526
    %v1627 = vpop.f32.mrf.mxu0
    %v1628 = vadd.f32 0.0, %v1627
    %v1629 = vpop.f32.mrf.mxu0
    %1630 = vmatprep.mubr.f32.mxu0 0.0
    %1631 = vmatmul.mubr.f32.gmra.mxu0 %v1529
    %v1632 = vpop.f32.mrf.mxu0
    %v1633 = vadd.f32 0.0, %v1632
    %v1634 = vpop.f32.mrf.mxu0
    %1635 = vdwg.mxu0
    %v1636 = vadd.f32 %v1346, %v1598
    %v1637 = vadd.f32 %v1351, %v1603
    %v1638 = vadd.f32 %v1356, %v1608
    %v1639 = vadd.f32 %v1361, %v1613
    %v1640 = vadd.f32 %v1366, %v1618
    %v1641 = vadd.f32 %v1371, %v1623
    %v1642 = vadd.f32 %v1376, %v1628
    %v1643 = vadd.f32 %v1381, %v1633
    %v1644 = vld [vmem:[#allocation7] sm:$0xff]
    %v1645 = vld [vmem:[#allocation7 + $0x8] sm:$0xff]
    %v1646 = vld [vmem:[%s4] sm:$0x1]
    %v1648 = vlaneseq
    %v1649 = vshrl.u32 %v1648, 7
    %v1650 = vsub.s32 0, %v1649
    %v1651 = vrot.slane %v1646, %v1650
    %vm1653 = vcmask 130048
    %v1655 = vsel %vm1653, %v1636, 0
    %v1658 = vsel %vm1653, %v1637, 0
    %v1661 = vsel %vm1653, %v1638, 0
    %v1664 = vsel %vm1653, %v1639, 0
    %v1667 = vsel %vm1653, %v1640, 0
    %v1670 = vsel %vm1653, %v1641, 0
    %v1673 = vsel %vm1653, %v1642, 0
    %v1676 = vsel %vm1653, %v1643, 0
    %1678 = vmatprep.subr.mxu0 0.0
    %1679 = vmatpush1.msra.mxu0 0.0
    %1680 = vmatprep.subr.mxu0 0.0
    %1681 = vmatpush1.msra.mxu0 0.0
    %1682 = vmatprep.subr.mxu0 0.0
    %1683 = vmatpush1.msra.mxu0 0.0
    %1684 = vmatprep.subr.mxu0 0.0
    %1685 = vmatpush1.msra.mxu0 0.0
    %1686 = vmatprep.subr.mxu0 0.0
    %1687 = vmatpush1.msra.mxu0 0.0
    %1688 = vmatprep.subr.mxu0 0.0
    %1689 = vmatpush1.msra.mxu0 0.0
    %1690 = vmatprep.subr.mxu0 0.0
    %1691 = vmatpush1.msra.mxu0 0.0
    %1692 = vmatprep.subr.mxu0 0.0
    %1693 = vmatpush1.msra.mxu0 0.0
    %1694 = vmatprep.subr.mxu0 0.0
    %1695 = vmatpush1.msra.mxu0 0.0
    %1696 = vmatprep.subr.mxu0 0.0
    %1697 = vmatpush1.msra.mxu0 0.0
    %1698 = vmatprep.subr.mxu0 0.0
    %1699 = vmatpush1.msra.mxu0 0.0
    %1700 = vmatprep.subr.mxu0 0.0
    %1701 = vmatpush1.msra.mxu0 0.0
    %1702 = vmatprep.subr.mxu0 0.0
    %1703 = vmatpush1.msra.mxu0 0.0
    %1704 = vmatprep.subr.mxu0 0.0
    %1705 = vmatpush1.msra.mxu0 0.0
    %1706 = vmatprep.subr.mxu0 0.0
    %1707 = vmatpush1.msra.mxu0 %v1645
    %1708 = vmatprep.subr.mxu0 0.0
    %1709 = vmatpush1.msra.mxu0 %v1644
    %1710 = vmatprep.subr.mxu0 0.0
    %1711 = vmatpush2.msra.mxu0 0.0
    %1712 = vmatprep.subr.mxu0 0.0
    %1713 = vmatpush2.msra.mxu0 0.0
    %1714 = vmatprep.subr.mxu0 0.0
    %1715 = vmatpush2.msra.mxu0 0.0
    %1716 = vmatprep.subr.mxu0 0.0
    %1717 = vmatpush2.msra.mxu0 0.0
    %1718 = vmatprep.subr.mxu0 0.0
    %1719 = vmatpush2.msra.mxu0 0.0
    %1720 = vmatprep.subr.mxu0 0.0
    %1721 = vmatpush2.msra.mxu0 0.0
    %1722 = vmatprep.subr.mxu0 0.0
    %1723 = vmatpush2.msra.mxu0 0.0
    %1724 = vmatprep.subr.mxu0 0.0
    %1725 = vmatpush2.msra.mxu0 0.0
    %1726 = vmatprep.subr.mxu0 0.0
    %1727 = vmatpush2.msra.mxu0 0.0
    %1728 = vmatprep.subr.mxu0 0.0
    %1729 = vmatpush2.msra.mxu0 0.0
    %1730 = vmatprep.subr.mxu0 0.0
    %1731 = vmatpush2.msra.mxu0 0.0
    %1732 = vmatprep.subr.mxu0 0.0
    %1733 = vmatpush2.msra.mxu0 0.0
    %1734 = vmatprep.subr.mxu0 0.0
    %1735 = vmatpush2.msra.mxu0 0.0
    %1736 = vmatprep.subr.mxu0 0.0
    %1737 = vmatpush2.msra.mxu0 0.0
    %1738 = vmatprep.subr.mxu0 0.0
    %1739 = vmatpush2.msra.mxu0 0.0
    %1740 = vmatprep.subr.mxu0 0.0
    %1741 = vmatpush2.msra.mxu0 0.0
    %1742 = vmatprep.mubr.f32.mxu0 0.0
    %1743 = vmatmul.mubr.f32.gmra.mxu0 %v1655
    %v1744 = vpop.f32.mrf.mxu0
    %v1745 = vadd.f32 %v1651, %v1744
    %v1746 = vpop.f32.mrf.mxu0
    %1747 = vmatprep.mubr.f32.mxu0 0.0
    %1748 = vmatmul.mubr.f32.gmra.mxu0 %v1658
    %v1749 = vpop.f32.mrf.mxu0
    %v1750 = vadd.f32 %v1651, %v1749
    %v1751 = vpop.f32.mrf.mxu0
    %1752 = vmatprep.mubr.f32.mxu0 0.0
    %1753 = vmatmul.mubr.f32.gmra.mxu0 %v1661
    %v1754 = vpop.f32.mrf.mxu0
    %v1755 = vadd.f32 %v1651, %v1754
    %v1756 = vpop.f32.mrf.mxu0
    %1757 = vmatprep.mubr.f32.mxu0 0.0
    %1758 = vmatmul.mubr.f32.gmra.mxu0 %v1664
    %v1759 = vpop.f32.mrf.mxu0
    %v1760 = vadd.f32 %v1651, %v1759
    %v1761 = vpop.f32.mrf.mxu0
    %1762 = vmatprep.mubr.f32.mxu0 0.0
    %1763 = vmatmul.mubr.f32.gmra.mxu0 %v1667
    %v1764 = vpop.f32.mrf.mxu0
    %v1765 = vadd.f32 %v1651, %v1764
    %v1766 = vpop.f32.mrf.mxu0
    %1767 = vmatprep.mubr.f32.mxu0 0.0
    %1768 = vmatmul.mubr.f32.gmra.mxu0 %v1670
    %v1769 = vpop.f32.mrf.mxu0
    %v1770 = vadd.f32 %v1651, %v1769
    %v1771 = vpop.f32.mrf.mxu0
    %1772 = vmatprep.mubr.f32.mxu0 0.0
    %1773 = vmatmul.mubr.f32.gmra.mxu0 %v1673
    %v1774 = vpop.f32.mrf.mxu0
    %v1775 = vadd.f32 %v1651, %v1774
    %v1776 = vpop.f32.mrf.mxu0
    %1777 = vmatprep.mubr.f32.mxu0 0.0
    %1778 = vmatmul.mubr.f32.gmra.mxu0 %v1676
    %v1779 = vpop.f32.mrf.mxu0
    %v1780 = vadd.f32 %v1651, %v1779
    %v1781 = vpop.f32.mrf.mxu0
    %1782 = vdwg.mxu0
    %v1783 = vld [vmem:[#allocation8] sm:$0xff]
    %v1784 = vld [vmem:[#allocation8 + $0x8] sm:$0xff]
    %v1785 = vld [vmem:[#allocation10] sm:$0x1]
    %v1786 = vld [vmem:[%s6] sm:$0xff]
    %v1788 = vlaneseq
    %v1789 = vshrl.u32 %v1788, 7
    %v1790 = vsub.s32 0, %v1789
    %v1791 = vrot.slane %v1785, %v1790
    %v1794 = vsel %vm1653, 0.0, 0
    %1796 = vmatprep.subr.mxu0 0.0
    %1797 = vmatpush1.msra.mxu0 0.0
    %1798 = vmatprep.subr.mxu0 0.0
    %1799 = vmatpush1.msra.mxu0 0.0
    %1800 = vmatprep.subr.mxu0 0.0
    %1801 = vmatpush1.msra.mxu0 0.0
    %1802 = vmatprep.subr.mxu0 0.0
    %1803 = vmatpush1.msra.mxu0 0.0
    %1804 = vmatprep.subr.mxu0 0.0
    %1805 = vmatpush1.msra.mxu0 0.0
    %1806 = vmatprep.subr.mxu0 0.0
    %1807 = vmatpush1.msra.mxu0 0.0
    %1808 = vmatprep.subr.mxu0 0.0
    %1809 = vmatpush1.msra.mxu0 0.0
    %1810 = vmatprep.subr.mxu0 0.0
    %1811 = vmatpush1.msra.mxu0 0.0
    %1812 = vmatprep.subr.mxu0 0.0
    %1813 = vmatpush1.msra.mxu0 0.0
    %1814 = vmatprep.subr.mxu0 0.0
    %1815 = vmatpush1.msra.mxu0 0.0
    %1816 = vmatprep.subr.mxu0 0.0
    %1817 = vmatpush1.msra.mxu0 0.0
    %1818 = vmatprep.subr.mxu0 0.0
    %1819 = vmatpush1.msra.mxu0 0.0
    %1820 = vmatprep.subr.mxu0 0.0
    %1821 = vmatpush1.msra.mxu0 0.0
    %1822 = vmatprep.subr.mxu0 0.0
    %1823 = vmatpush1.msra.mxu0 0.0
    %1824 = vmatprep.subr.mxu0 0.0
    %1825 = vmatpush1.msra.mxu0 %v1784
    %1826 = vmatprep.subr.mxu0 0.0
    %1827 = vmatpush1.msra.mxu0 %v1783
    %1828 = vmatprep.subr.mxu0 0.0
    %1829 = vmatpush2.msra.mxu0 0.0
    %1830 = vmatprep.subr.mxu0 0.0
    %1831 = vmatpush2.msra.mxu0 0.0
    %1832 = vmatprep.subr.mxu0 0.0
    %1833 = vmatpush2.msra.mxu0 0.0
    %1834 = vmatprep.subr.mxu0 0.0
    %1835 = vmatpush2.msra.mxu0 0.0
    %1836 = vmatprep.subr.mxu0 0.0
    %1837 = vmatpush2.msra.mxu0 0.0
    %1838 = vmatprep.subr.mxu0 0.0
    %1839 = vmatpush2.msra.mxu0 0.0
    %1840 = vmatprep.subr.mxu0 0.0
    %1841 = vmatpush2.msra.mxu0 0.0
    %1842 = vmatprep.subr.mxu0 0.0
    %1843 = vmatpush2.msra.mxu0 0.0
    %1844 = vmatprep.subr.mxu0 0.0
    %1845 = vmatpush2.msra.mxu0 0.0
    %1846 = vmatprep.subr.mxu0 0.0
    %1847 = vmatpush2.msra.mxu0 0.0
    %1848 = vmatprep.subr.mxu0 0.0
    %1849 = vmatpush2.msra.mxu0 0.0
    %1850 = vmatprep.subr.mxu0 0.0
    %1851 = vmatpush2.msra.mxu0 0.0
    %1852 = vmatprep.subr.mxu0 0.0
    %1853 = vmatpush2.msra.mxu0 0.0
    %1854 = vmatprep.subr.mxu0 0.0
    %1855 = vmatpush2.msra.mxu0 0.0
    %1856 = vmatprep.subr.mxu0 0.0
    %1857 = vmatpush2.msra.mxu0 0.0
    %1858 = vmatprep.subr.mxu0 0.0
    %1859 = vmatpush2.msra.mxu0 0.0
    %1860 = vmatprep.mubr.f32.mxu0 0.0
    %1861 = vmatmul.mubr.f32.gmra.mxu0 %v1794
    %v1862 = vpop.f32.mrf.mxu0
    %v1863 = vadd.f32 %v1791, %v1862
    %v1864 = vpop.f32.mrf.mxu0
    %1865 = vmatprep.mubr.f32.mxu0 0.0
    %1866 = vmatmul.mubr.f32.gmra.mxu0 %v1794
    %v1867 = vpop.f32.mrf.mxu0
    %v1868 = vadd.f32 %v1791, %v1867
    %v1869 = vpop.f32.mrf.mxu0
    %1870 = vdwg.mxu0
    %v1871 = vadd.f32 %v1745, %v1863
    %v1872 = vadd.f32 %v1750, %v1868
    %v1873 = vxor.u32 %v1871, 2147483648
    %v1874 = vxor.u32 %v1872, 2147483648
    %v1875 = vmul.f32 %v1873, 1.442695
    %v1876 = vpow.pop %v1875
    %v1877 = vmul.f32 %v1874, 1.442695
    %v1878 = vpow.pop %v1877
    %v1879 = vadd.f32 %v1876, 1.0
    %v1880 = vadd.f32 %v1878, 1.0
    %v1881 = vrcp.pop %v1879
    %v1882 = vmul.f32 1.0, %v1881
    %v1883 = vrcp.pop %v1880
    %v1884 = vmul.f32 1.0, %v1883
    %1887 = vrot.lane.b32.xlu0 %v1863, 96
    %v1888 = vpop.permute.xlu0 %1887
    %1889 = vrot.lane.b32.xlu0 %v1868, 96
    %v1890 = vpop.permute.xlu0 %1889
    %v1893 = vmul.f32 %v1882, %v1888
    %v1894 = vmul.f32 %v1884, %v1890
    %1897 = vrot.lane.b32.xlu0 %v1893, 32
    %v1898 = vpop.permute.xlu0 %1897
    %1899 = vrot.lane.b32.xlu0 %v1894, 32
    %v1900 = vpop.permute.xlu0 %1899
    %v1903 = vadd.f32 %v1745, %v1898
    %v1904 = vadd.f32 %v1750, %v1900
    %v1905 = vtanh.pop %v1903
    %v1906 = vtanh.pop %v1904
    %v1907 = vsub.f32 1.0, %v1882
    %v1908 = vsub.f32 1.0, %v1884
    %1911 = vrot.lane.b32.xlu0 %v1905, 112
    %v1912 = vpop.permute.xlu0 %1911
    %1913 = vrot.lane.b32.xlu0 %v1906, 112
    %v1914 = vpop.permute.xlu0 %1913
    %v1917 = vmul.f32 %v1907, %v1912
    %v1918 = vmul.f32 %v1908, %v1914
    %v1919 = vmul.f32 %v1882, 0.0
    %v1920 = vmul.f32 %v1884, 0.0
    %v1921 = vadd.f32 %v1917, %v1919
    %v1922 = vadd.f32 %v1918, %v1920
    %1924 = vrot.lane.b32.xlu0 %v1786, 16
    %v1925 = vpop.permute.xlu0 %1924
    %v1927 = vmul.f32 %v1921, %v1925
    %v1928 = vmul.f32 %v1922, %v1925
    %1931 = vrot.lane.b32.xlu0 %v1927, 112
    %v1932 = vpop.permute.xlu0 %1931
    %1933 = vrot.lane.b32.xlu0 %v1928, 112
    %v1934 = vpop.permute.xlu0 %1933
    %v1937 = vsel %vm1653, %v1932, 0.0
    %1938 = vadd.xlane.f32.xlu0 %v1937
    %v1939 = vpop.xlane.xlu0 %1938
    %v1940 = vsel %vm1653, %v1934, 0.0
    %1941 = vadd.xlane.f32.xlu0 %v1940
    %v1942 = vpop.xlane.xlu0 %1941
    %v1943 = vadd.f32 %v1939, 0.0
    %v1944 = vadd.f32 %v1942, 0.0
    %1947 = vrot.lane.b32.xlu0 %v1921, 112
    %v1948 = vpop.permute.xlu0 %1947
    %1949 = vrot.lane.b32.xlu0 %v1922, 112
    %v1950 = vpop.permute.xlu0 %1949
    %v1951 = vsel %vm1653, %v1948, 0
    %v1953 = vsel %vm1653, %v1950, 0
    %1955 = vmatprep.subr.mxu0 0.0
    %1956 = vmatpush1.msra.mxu0 0.0
    %1957 = vmatprep.subr.mxu0 0.0
    %1958 = vmatpush1.msra.mxu0 0.0
    %1959 = vmatprep.subr.mxu0 0.0
    %1960 = vmatpush1.msra.mxu0 0.0
    %1961 = vmatprep.subr.mxu0 0.0
    %1962 = vmatpush1.msra.mxu0 0.0
    %1963 = vmatprep.subr.mxu0 0.0
    %1964 = vmatpush1.msra.mxu0 0.0
    %1965 = vmatprep.subr.mxu0 0.0
    %1966 = vmatpush1.msra.mxu0 0.0
    %1967 = vmatprep.subr.mxu0 0.0
    %1968 = vmatpush1.msra.mxu0 0.0
    %1969 = vmatprep.subr.mxu0 0.0
    %1970 = vmatpush1.msra.mxu0 0.0
    %1971 = vmatprep.subr.mxu0 0.0
    %1972 = vmatpush1.msra.mxu0 0.0
    %1973 = vmatprep.subr.mxu0 0.0
    %1974 = vmatpush1.msra.mxu0 0.0
    %1975 = vmatprep.subr.mxu0 0.0
    %1976 = vmatpush1.msra.mxu0 0.0
    %1977 = vmatprep.subr.mxu0 0.0
    %1978 = vmatpush1.msra.mxu0 0.0
    %1979 = vmatprep.subr.mxu0 0.0
    %1980 = vmatpush1.msra.mxu0 0.0
    %1981 = vmatprep.subr.mxu0 0.0
    %1982 = vmatpush1.msra.mxu0 0.0
    %1983 = vmatprep.subr.mxu0 0.0
    %1984 = vmatpush1.msra.mxu0 %v1784
    %1985 = vmatprep.subr.mxu0 0.0
    %1986 = vmatpush1.msra.mxu0 %v1783
    %1987 = vmatprep.subr.mxu0 0.0
    %1988 = vmatpush2.msra.mxu0 0.0
    %1989 = vmatprep.subr.mxu0 0.0
    %1990 = vmatpush2.msra.mxu0 0.0
    %1991 = vmatprep.subr.mxu0 0.0
    %1992 = vmatpush2.msra.mxu0 0.0
    %1993 = vmatprep.subr.mxu0 0.0
    %1994 = vmatpush2.msra.mxu0 0.0
    %1995 = vmatprep.subr.mxu0 0.0
    %1996 = vmatpush2.msra.mxu0 0.0
    %1997 = vmatprep.subr.mxu0 0.0
    %1998 = vmatpush2.msra.mxu0 0.0
    %1999 = vmatprep.subr.mxu0 0.0
    %2000 = vmatpush2.msra.mxu0 0.0
    %2001 = vmatprep.subr.mxu0 0.0
    %2002 = vmatpush2.msra.mxu0 0.0
    %2003 = vmatprep.subr.mxu0 0.0
    %2004 = vmatpush2.msra.mxu0 0.0
    %2005 = vmatprep.subr.mxu0 0.0
    %2006 = vmatpush2.msra.mxu0 0.0
    %2007 = vmatprep.subr.mxu0 0.0
    %2008 = vmatpush2.msra.mxu0 0.0
    %2009 = vmatprep.subr.mxu0 0.0
    %2010 = vmatpush2.msra.mxu0 0.0
    %2011 = vmatprep.subr.mxu0 0.0
    %2012 = vmatpush2.msra.mxu0 0.0
    %2013 = vmatprep.subr.mxu0 0.0
    %2014 = vmatpush2.msra.mxu0 0.0
    %2015 = vmatprep.subr.mxu0 0.0
    %2016 = vmatpush2.msra.mxu0 0.0
    %2017 = vmatprep.subr.mxu0 0.0
    %2018 = vmatpush2.msra.mxu0 0.0
    %2019 = vmatprep.mubr.f32.mxu0 0.0
    %2020 = vmatmul.mubr.f32.gmra.mxu0 %v1951
    %v2021 = vpop.f32.mrf.mxu0
    %v2022 = vadd.f32 %v1791, %v2021
    %v2023 = vpop.f32.mrf.mxu0
    %2024 = vmatprep.mubr.f32.mxu0 0.0
    %2025 = vmatmul.mubr.f32.gmra.mxu0 %v1953
    %v2026 = vpop.f32.mrf.mxu0
    %v2027 = vadd.f32 %v1791, %v2026
    %v2028 = vpop.f32.mrf.mxu0
    %2029 = vdwg.mxu0
    %v2030 = vadd.f32 %v1755, %v2022
    %v2031 = vadd.f32 %v1760, %v2027
    %v2032 = vxor.u32 %v2030, 2147483648
    %v2033 = vxor.u32 %v2031, 2147483648
    %v2034 = vmul.f32 %v2032, 1.442695
    %v2035 = vpow.pop %v2034
    %v2036 = vmul.f32 %v2033, 1.442695
    %v2037 = vpow.pop %v2036
    %v2038 = vadd.f32 %v2035, 1.0
    %v2039 = vadd.f32 %v2037, 1.0
    %v2040 = vrcp.pop %v2038
    %v2041 = vmul.f32 1.0, %v2040
    %v2042 = vrcp.pop %v2039
    %v2043 = vmul.f32 1.0, %v2042
    %2046 = vrot.lane.b32.xlu0 %v2022, 96
    %v2047 = vpop.permute.xlu0 %2046
    %2048 = vrot.lane.b32.xlu0 %v2027, 96
    %v2049 = vpop.permute.xlu0 %2048
    %v2052 = vmul.f32 %v2041, %v2047
    %v2053 = vmul.f32 %v2043, %v2049
    %2056 = vrot.lane.b32.xlu0 %v2052, 32
    %v2057 = vpop.permute.xlu0 %2056
    %2058 = vrot.lane.b32.xlu0 %v2053, 32
    %v2059 = vpop.permute.xlu0 %2058
    %v2062 = vadd.f32 %v1755, %v2057
    %v2063 = vadd.f32 %v1760, %v2059
    %v2064 = vtanh.pop %v2062
    %v2065 = vtanh.pop %v2063
    %v2066 = vsub.f32 1.0, %v2041
    %v2067 = vsub.f32 1.0, %v2043
    %2070 = vrot.lane.b32.xlu0 %v2064, 112
    %v2071 = vpop.permute.xlu0 %2070
    %2072 = vrot.lane.b32.xlu0 %v2065, 112
    %v2073 = vpop.permute.xlu0 %2072
    %v2076 = vmul.f32 %v2066, %v2071
    %v2077 = vmul.f32 %v2067, %v2073
    %v2078 = vmul.f32 %v2041, %v1921
    %v2079 = vmul.f32 %v2043, %v1922
    %v2080 = vadd.f32 %v2076, %v2078
    %v2081 = vadd.f32 %v2077, %v2079
    %v2082 = vmul.f32 %v2080, %v1786
    %v2083 = vmul.f32 %v2081, %v1786
    %2086 = vrot.lane.b32.xlu0 %v2082, 112
    %v2087 = vpop.permute.xlu0 %2086
    %2088 = vrot.lane.b32.xlu0 %v2083, 112
    %v2089 = vpop.permute.xlu0 %2088
    %v2092 = vsel %vm1653, %v2087, 0.0
    %2093 = vadd.xlane.f32.xlu0 %v2092
    %v2094 = vpop.xlane.xlu0 %2093
    %v2095 = vsel %vm1653, %v2089, 0.0
    %2096 = vadd.xlane.f32.xlu0 %v2095
    %v2097 = vpop.xlane.xlu0 %2096
    %v2098 = vadd.f32 %v1943, %v2094
    %v2099 = vadd.f32 %v1944, %v2097
    %2102 = vrot.lane.b32.xlu0 %v2080, 112
    %v2103 = vpop.permute.xlu0 %2102
    %2104 = vrot.lane.b32.xlu0 %v2081, 112
    %v2105 = vpop.permute.xlu0 %2104
    %v2106 = vsel %vm1653, %v2103, 0
    %v2108 = vsel %vm1653, %v2105, 0
    %2110 = vmatprep.subr.mxu0 0.0
    %2111 = vmatpush1.msra.mxu0 0.0
    %2112 = vmatprep.subr.mxu0 0.0
    %2113 = vmatpush1.msra.mxu0 0.0
    %2114 = vmatprep.subr.mxu0 0.0
    %2115 = vmatpush1.msra.mxu0 0.0
    %2116 = vmatprep.subr.mxu0 0.0
    %2117 = vmatpush1.msra.mxu0 0.0
    %2118 = vmatprep.subr.mxu0 0.0
    %2119 = vmatpush1.msra.mxu0 0.0
    %2120 = vmatprep.subr.mxu0 0.0
    %2121 = vmatpush1.msra.mxu0 0.0
    %2122 = vmatprep.subr.mxu0 0.0
    %2123 = vmatpush1.msra.mxu0 0.0
    %2124 = vmatprep.subr.mxu0 0.0
    %2125 = vmatpush1.msra.mxu0 0.0
    %2126 = vmatprep.subr.mxu0 0.0
    %2127 = vmatpush1.msra.mxu0 0.0
    %2128 = vmatprep.subr.mxu0 0.0
    %2129 = vmatpush1.msra.mxu0 0.0
    %2130 = vmatprep.subr.mxu0 0.0
    %2131 = vmatpush1.msra.mxu0 0.0
    %2132 = vmatprep.subr.mxu0 0.0
    %2133 = vmatpush1.msra.mxu0 0.0
    %2134 = vmatprep.subr.mxu0 0.0
    %2135 = vmatpush1.msra.mxu0 0.0
    %2136 = vmatprep.subr.mxu0 0.0
    %2137 = vmatpush1.msra.mxu0 0.0
    %2138 = vmatprep.subr.mxu0 0.0
    %2139 = vmatpush1.msra.mxu0 %v1784
    %2140 = vmatprep.subr.mxu0 0.0
    %2141 = vmatpush1.msra.mxu0 %v1783
    %2142 = vmatprep.subr.mxu0 0.0
    %2143 = vmatpush2.msra.mxu0 0.0
    %2144 = vmatprep.subr.mxu0 0.0
    %2145 = vmatpush2.msra.mxu0 0.0
    %2146 = vmatprep.subr.mxu0 0.0
    %2147 = vmatpush2.msra.mxu0 0.0
    %2148 = vmatprep.subr.mxu0 0.0
    %2149 = vmatpush2.msra.mxu0 0.0
    %2150 = vmatprep.subr.mxu0 0.0
    %2151 = vmatpush2.msra.mxu0 0.0
    %2152 = vmatprep.subr.mxu0 0.0
    %2153 = vmatpush2.msra.mxu0 0.0
    %2154 = vmatprep.subr.mxu0 0.0
    %2155 = vmatpush2.msra.mxu0 0.0
    %2156 = vmatprep.subr.mxu0 0.0
    %2157 = vmatpush2.msra.mxu0 0.0
    %2158 = vmatprep.subr.mxu0 0.0
    %2159 = vmatpush2.msra.mxu0 0.0
    %2160 = vmatprep.subr.mxu0 0.0
    %2161 = vmatpush2.msra.mxu0 0.0
    %2162 = vmatprep.subr.mxu0 0.0
    %2163 = vmatpush2.msra.mxu0 0.0
    %2164 = vmatprep.subr.mxu0 0.0
    %2165 = vmatpush2.msra.mxu0 0.0
    %2166 = vmatprep.subr.mxu0 0.0
    %2167 = vmatpush2.msra.mxu0 0.0
    %2168 = vmatprep.subr.mxu0 0.0
    %2169 = vmatpush2.msra.mxu0 0.0
    %2170 = vmatprep.subr.mxu0 0.0
    %2171 = vmatpush2.msra.mxu0 0.0
    %2172 = vmatprep.subr.mxu0 0.0
    %2173 = vmatpush2.msra.mxu0 0.0
    %2174 = vmatprep.mubr.f32.mxu0 0.0
    %2175 = vmatmul.mubr.f32.gmra.mxu0 %v2106
    %v2176 = vpop.f32.mrf.mxu0
    %v2177 = vadd.f32 %v1791, %v2176
    %v2178 = vpop.f32.mrf.mxu0
    %2179 = vmatprep.mubr.f32.mxu0 0.0
    %2180 = vmatmul.mubr.f32.gmra.mxu0 %v2108
    %v2181 = vpop.f32.mrf.mxu0
    %v2182 = vadd.f32 %v1791, %v2181
    %v2183 = vpop.f32.mrf.mxu0
    %2184 = vdwg.mxu0
    %v2185 = vadd.f32 %v1765, %v2177
    %v2186 = vadd.f32 %v1770, %v2182
    %v2187 = vxor.u32 %v2185, 2147483648
    %v2188 = vxor.u32 %v2186, 2147483648
    %v2189 = vmul.f32 %v2187, 1.442695
    %v2190 = vpow.pop %v2189
    %v2191 = vmul.f32 %v2188, 1.442695
    %v2192 = vpow.pop %v2191
    %v2193 = vadd.f32 %v2190, 1.0
    %v2194 = vadd.f32 %v2192, 1.0
    %v2195 = vrcp.pop %v2193
    %v2196 = vmul.f32 1.0, %v2195
    %v2197 = vrcp.pop %v2194
    %v2198 = vmul.f32 1.0, %v2197
    %2201 = vrot.lane.b32.xlu0 %v2177, 96
    %v2202 = vpop.permute.xlu0 %2201
    %2203 = vrot.lane.b32.xlu0 %v2182, 96
    %v2204 = vpop.permute.xlu0 %2203
    %v2207 = vmul.f32 %v2196, %v2202
    %v2208 = vmul.f32 %v2198, %v2204
    %2211 = vrot.lane.b32.xlu0 %v2207, 32
    %v2212 = vpop.permute.xlu0 %2211
    %2213 = vrot.lane.b32.xlu0 %v2208, 32
    %v2214 = vpop.permute.xlu0 %2213
    %v2217 = vadd.f32 %v1765, %v2212
    %v2218 = vadd.f32 %v1770, %v2214
    %v2219 = vtanh.pop %v2217
    %v2220 = vtanh.pop %v2218
    %v2221 = vsub.f32 1.0, %v2196
    %v2222 = vsub.f32 1.0, %v2198
    %2225 = vrot.lane.b32.xlu0 %v2219, 112
    %v2226 = vpop.permute.xlu0 %2225
    %2227 = vrot.lane.b32.xlu0 %v2220, 112
    %v2228 = vpop.permute.xlu0 %2227
    %v2231 = vmul.f32 %v2221, %v2226
    %v2232 = vmul.f32 %v2222, %v2228
    %v2233 = vmul.f32 %v2196, %v2080
    %v2234 = vmul.f32 %v2198, %v2081
    %v2235 = vadd.f32 %v2231, %v2233
    %v2236 = vadd.f32 %v2232, %v2234
    %2237 = vrot.lane.b32.xlu0 %v1786, 112
    %v2238 = vpop.permute.xlu0 %2237
    %v2240 = vmul.f32 %v2235, %v2238
    %v2241 = vmul.f32 %v2236, %v2238
    %2244 = vrot.lane.b32.xlu0 %v2240, 112
    %v2245 = vpop.permute.xlu0 %2244
    %2246 = vrot.lane.b32.xlu0 %v2241, 112
    %v2247 = vpop.permute.xlu0 %2246
    %v2250 = vsel %vm1653, %v2245, 0.0
    %2251 = vadd.xlane.f32.xlu0 %v2250
    %v2252 = vpop.xlane.xlu0 %2251
    %v2253 = vsel %vm1653, %v2247, 0.0
    %2254 = vadd.xlane.f32.xlu0 %v2253
    %v2255 = vpop.xlane.xlu0 %2254
    %v2256 = vadd.f32 %v2098, %v2252
    %v2257 = vadd.f32 %v2099, %v2255
    %2260 = vrot.lane.b32.xlu0 %v2235, 112
    %v2261 = vpop.permute.xlu0 %2260
    %2262 = vrot.lane.b32.xlu0 %v2236, 112
    %v2263 = vpop.permute.xlu0 %2262
    %v2264 = vsel %vm1653, %v2261, 0
    %v2266 = vsel %vm1653, %v2263, 0
    %2268 = vmatprep.subr.mxu0 0.0
    %2269 = vmatpush1.msra.mxu0 0.0
    %2270 = vmatprep.subr.mxu0 0.0
    %2271 = vmatpush1.msra.mxu0 0.0
    %2272 = vmatprep.subr.mxu0 0.0
    %2273 = vmatpush1.msra.mxu0 0.0
    %2274 = vmatprep.subr.mxu0 0.0
    %2275 = vmatpush1.msra.mxu0 0.0
    %2276 = vmatprep.subr.mxu0 0.0
    %2277 = vmatpush1.msra.mxu0 0.0
    %2278 = vmatprep.subr.mxu0 0.0
    %2279 = vmatpush1.msra.mxu0 0.0
    %2280 = vmatprep.subr.mxu0 0.0
    %2281 = vmatpush1.msra.mxu0 0.0
    %2282 = vmatprep.subr.mxu0 0.0
    %2283 = vmatpush1.msra.mxu0 0.0
    %2284 = vmatprep.subr.mxu0 0.0
    %2285 = vmatpush1.msra.mxu0 0.0
    %2286 = vmatprep.subr.mxu0 0.0
    %2287 = vmatpush1.msra.mxu0 0.0
    %2288 = vmatprep.subr.mxu0 0.0
    %2289 = vmatpush1.msra.mxu0 0.0
    %2290 = vmatprep.subr.mxu0 0.0
    %2291 = vmatpush1.msra.mxu0 0.0
    %2292 = vmatprep.subr.mxu0 0.0
    %2293 = vmatpush1.msra.mxu0 0.0
    %2294 = vmatprep.subr.mxu0 0.0
    %2295 = vmatpush1.msra.mxu0 0.0
    %2296 = vmatprep.subr.mxu0 0.0
    %2297 = vmatpush1.msra.mxu0 %v1784
    %2298 = vmatprep.subr.mxu0 0.0
    %2299 = vmatpush1.msra.mxu0 %v1783
    %2300 = vmatprep.subr.mxu0 0.0
    %2301 = vmatpush2.msra.mxu0 0.0
    %2302 = vmatprep.subr.mxu0 0.0
    %2303 = vmatpush2.msra.mxu0 0.0
    %2304 = vmatprep.subr.mxu0 0.0
    %2305 = vmatpush2.msra.mxu0 0.0
    %2306 = vmatprep.subr.mxu0 0.0
    %2307 = vmatpush2.msra.mxu0 0.0
    %2308 = vmatprep.subr.mxu0 0.0
    %2309 = vmatpush2.msra.mxu0 0.0
    %2310 = vmatprep.subr.mxu0 0.0
    %2311 = vmatpush2.msra.mxu0 0.0
    %2312 = vmatprep.subr.mxu0 0.0
    %2313 = vmatpush2.msra.mxu0 0.0
    %2314 = vmatprep.subr.mxu0 0.0
    %2315 = vmatpush2.msra.mxu0 0.0
    %2316 = vmatprep.subr.mxu0 0.0
    %2317 = vmatpush2.msra.mxu0 0.0
    %2318 = vmatprep.subr.mxu0 0.0
    %2319 = vmatpush2.msra.mxu0 0.0
    %2320 = vmatprep.subr.mxu0 0.0
    %2321 = vmatpush2.msra.mxu0 0.0
    %2322 = vmatprep.subr.mxu0 0.0
    %2323 = vmatpush2.msra.mxu0 0.0
    %2324 = vmatprep.subr.mxu0 0.0
    %2325 = vmatpush2.msra.mxu0 0.0
    %2326 = vmatprep.subr.mxu0 0.0
    %2327 = vmatpush2.msra.mxu0 0.0
    %2328 = vmatprep.subr.mxu0 0.0
    %2329 = vmatpush2.msra.mxu0 0.0
    %2330 = vmatprep.subr.mxu0 0.0
    %2331 = vmatpush2.msra.mxu0 0.0
    %2332 = vmatprep.mubr.f32.mxu0 0.0
    %2333 = vmatmul.mubr.f32.gmra.mxu0 %v2264
    %v2334 = vpop.f32.mrf.mxu0
    %v2335 = vadd.f32 %v1791, %v2334
    %v2336 = vpop.f32.mrf.mxu0
    %2337 = vmatprep.mubr.f32.mxu0 0.0
    %2338 = vmatmul.mubr.f32.gmra.mxu0 %v2266
    %v2339 = vpop.f32.mrf.mxu0
    %v2340 = vadd.f32 %v1791, %v2339
    %v2341 = vpop.f32.mrf.mxu0
    %2342 = vdwg.mxu0
    %v2343 = vadd.f32 %v1775, %v2335
    %v2344 = vadd.f32 %v1780, %v2340
    %v2345 = vxor.u32 %v2343, 2147483648
    %v2346 = vxor.u32 %v2344, 2147483648
    %v2347 = vmul.f32 %v2345, 1.442695
    %v2348 = vpow.pop %v2347
    %v2349 = vmul.f32 %v2346, 1.442695
    %v2350 = vpow.pop %v2349
    %v2351 = vadd.f32 %v2348, 1.0
    %v2352 = vadd.f32 %v2350, 1.0
    %v2353 = vrcp.pop %v2351
    %v2354 = vmul.f32 1.0, %v2353
    %v2355 = vrcp.pop %v2352
    %v2356 = vmul.f32 1.0, %v2355
    %2359 = vrot.lane.b32.xlu0 %v2335, 96
    %v2360 = vpop.permute.xlu0 %2359
    %2361 = vrot.lane.b32.xlu0 %v2340, 96
    %v2362 = vpop.permute.xlu0 %2361
    %v2365 = vmul.f32 %v2354, %v2360
    %v2366 = vmul.f32 %v2356, %v2362
    %2369 = vrot.lane.b32.xlu0 %v2365, 32
    %v2370 = vpop.permute.xlu0 %2369
    %2371 = vrot.lane.b32.xlu0 %v2366, 32
    %v2372 = vpop.permute.xlu0 %2371
    %v2375 = vadd.f32 %v1775, %v2370
    %v2376 = vadd.f32 %v1780, %v2372
    %v2377 = vtanh.pop %v2375
    %v2378 = vtanh.pop %v2376
    %v2379 = vsub.f32 1.0, %v2354
    %v2380 = vsub.f32 1.0, %v2356
    %2383 = vrot.lane.b32.xlu0 %v2377, 112
    %v2384 = vpop.permute.xlu0 %2383
    %2385 = vrot.lane.b32.xlu0 %v2378, 112
    %v2386 = vpop.permute.xlu0 %2385
    %v2389 = vmul.f32 %v2379, %v2384
    %v2390 = vmul.f32 %v2380, %v2386
    %v2391 = vmul.f32 %v2354, %v2235
    %v2392 = vmul.f32 %v2356, %v2236
    %v2393 = vadd.f32 %v2389, %v2391
    %v2394 = vadd.f32 %v2390, %v2392
    %2395 = vrot.lane.b32.xlu0 %v1786, 96
    %v2396 = vpop.permute.xlu0 %2395
    %v2398 = vmul.f32 %v2393, %v2396
    %v2399 = vmul.f32 %v2394, %v2396
    %2402 = vrot.lane.b32.xlu0 %v2398, 112
    %v2403 = vpop.permute.xlu0 %2402
    %2404 = vrot.lane.b32.xlu0 %v2399, 112
    %v2405 = vpop.permute.xlu0 %2404
    %v2408 = vsel %vm1653, %v2403, 0.0
    %2409 = vadd.xlane.f32.xlu0 %v2408
    %v2410 = vpop.xlane.xlu0 %2409
    %v2411 = vsel %vm1653, %v2405, 0.0
    %2412 = vadd.xlane.f32.xlu0 %v2411
    %v2413 = vpop.xlane.xlu0 %2412
    %v2414 = vadd.f32 %v2256, %v2410
    %v2415 = vadd.f32 %v2257, %v2413
    %vm2416 = vcmp.eq.s32.totalorder %v384, %v366
    %v2417 = vsel %vm2416, 1, 0
    %v2418 = vcvt.s32.f32 %v2417
    %v2419 = vld [vmem:[#allocation2] sm:$0x1]
    %v2421 = vlaneseq
    %v2422 = vshrl.u32 %v2421, 7
    %v2423 = vsub.s32 0, %v2422
    %v2424 = vrot.slane %v2419, %v2423
    %v2427 = vsel %vm1653, %v2418, 0
    %2429 = vmatprep.subr.mxu0 0.0
    %2430 = vmatpush1.msra.mxu0 0.0
    %2431 = vmatprep.subr.mxu0 0.0
    %2432 = vmatpush1.msra.mxu0 0.0
    %2433 = vmatprep.subr.mxu0 0.0
    %2434 = vmatpush1.msra.mxu0 0.0
    %2435 = vmatprep.subr.mxu0 0.0
    %2436 = vmatpush1.msra.mxu0 0.0
    %2437 = vmatprep.subr.mxu0 0.0
    %2438 = vmatpush1.msra.mxu0 0.0
    %2439 = vmatprep.subr.mxu0 0.0
    %2440 = vmatpush1.msra.mxu0 0.0
    %2441 = vmatprep.subr.mxu0 0.0
    %2442 = vmatpush1.msra.mxu0 0.0
    %2443 = vmatprep.subr.mxu0 0.0
    %2444 = vmatpush1.msra.mxu0 0.0
    %2445 = vmatprep.subr.mxu0 0.0
    %2446 = vmatpush1.msra.mxu0 0.0
    %2447 = vmatprep.subr.mxu0 0.0
    %2448 = vmatpush1.msra.mxu0 0.0
    %2449 = vmatprep.subr.mxu0 0.0
    %2450 = vmatpush1.msra.mxu0 0.0
    %2451 = vmatprep.subr.mxu0 0.0
    %2452 = vmatpush1.msra.mxu0 0.0
    %2453 = vmatprep.subr.mxu0 0.0
    %2454 = vmatpush1.msra.mxu0 0.0
    %2455 = vmatprep.subr.mxu0 0.0
    %2456 = vmatpush1.msra.mxu0 0.0
    %2457 = vmatprep.subr.mxu0 0.0
    %2458 = vmatpush1.msra.mxu0 %v2415
    %2459 = vmatprep.subr.mxu0 0.0
    %2460 = vmatpush1.msra.mxu0 %v2414
    %2461 = vmatprep.subr.mxu0 0.0
    %2462 = vmatpush2.msra.mxu0 0.0
    %2463 = vmatprep.subr.mxu0 0.0
    %2464 = vmatpush2.msra.mxu0 0.0
    %2465 = vmatprep.subr.mxu0 0.0
    %2466 = vmatpush2.msra.mxu0 0.0
    %2467 = vmatprep.subr.mxu0 0.0
    %2468 = vmatpush2.msra.mxu0 0.0
    %2469 = vmatprep.subr.mxu0 0.0
    %2470 = vmatpush2.msra.mxu0 0.0
    %2471 = vmatprep.subr.mxu0 0.0
    %2472 = vmatpush2.msra.mxu0 0.0
    %2473 = vmatprep.subr.mxu0 0.0
    %2474 = vmatpush2.msra.mxu0 0.0
    %2475 = vmatprep.subr.mxu0 0.0
    %2476 = vmatpush2.msra.mxu0 0.0
    %2477 = vmatprep.subr.mxu0 0.0
    %2478 = vmatpush2.msra.mxu0 0.0
    %2479 = vmatprep.subr.mxu0 0.0
    %2480 = vmatpush2.msra.mxu0 0.0
    %2481 = vmatprep.subr.mxu0 0.0
    %2482 = vmatpush2.msra.mxu0 0.0
    %2483 = vmatprep.subr.mxu0 0.0
    %2484 = vmatpush2.msra.mxu0 0.0
    %2485 = vmatprep.subr.mxu0 0.0
    %2486 = vmatpush2.msra.mxu0 0.0
    %2487 = vmatprep.subr.mxu0 0.0
    %2488 = vmatpush2.msra.mxu0 0.0
    %2489 = vmatprep.subr.mxu0 0.0
    %2490 = vmatpush2.msra.mxu0 0.0
    %2491 = vmatprep.subr.mxu0 0.0
    %2492 = vmatpush2.msra.mxu0 0.0
    %2493 = vmatprep.mubr.f32.mxu0 0.0
    %2494 = vmatmul.mubr.f32.gmra.mxu0 %v2427
    %v2495 = vpop.f32.mrf.mxu0
    %v2496 = vadd.f32 %v2424, %v2495
    %v2497 = vpop.f32.mrf.mxu0
    %2498 = vdwg.mxu0
    %vm2499 = vcmask 1024
    %2500 = vst.msk [vmem:[%s8] sm:$0x3] %vm2499, %v2496
    // Predicated region
    $region54: #{stgnn_forward.1} parent=1 // pred_check
      _
    $region55: #{stgnn_forward.1} parent=1 // pred_check_branch
      %2502 = sbr.rel (0) target = $region57
    $region56: #{stgnn_forward.1} parent=1 // pred_region
      _
    $region57: #{stgnn_forward.1} parent=1 // pred_fallthru
      _
    // Predicated region
    $region58: #{stgnn_forward.1} parent=1 // pred_check
      _
    $region59: #{stgnn_forward.1} parent=1 // pred_check_branch
      %2504 = sbr.rel (0) target = $region61
    $region60: #{stgnn_forward.1} parent=1 // pred_region
      _
    $region61: #{stgnn_forward.1} parent=1 // pred_fallthru
      _
    %2505 = vsyncpa [#allocation4], 1
    %2506 = vsyncpa [#allocation6], 1
    %2507 = vsyncpa [#allocation9], 1

</llo_original>
